<compile_context>
chip_gen: v7x
topology: tpu7x:2x2x1
jax: 0.10.0
libtpu: 0.0.40
codegen_flags: <defaults>
</compile_context>

<pallas_src>
import functools

import jax
import jax.numpy as jnp
from jax.experimental import pallas as pl
from jax.experimental.pallas import tpu as pltpu


_LANE = 128      # pad each GRU gate to a full vreg lane width
_SUBLANE = 8     # pad batch to a full sublane group


def rnn_encoder_kernel(x_ref, w_in_ref, b_in_ref, whh_ref,
                       bhh_nf_ref, bhh_nb_ref,
                       wlin_f_ref, wlin_b_ref, blin_ref,
                       out_ref):
    Bp = out_ref.shape[0]
    Hp = whh_ref.shape[0]
    T = x_ref.shape[0] // Bp

    # Hoisted, time-invariant input projection for BOTH directions:
    # one MXU call covering all T steps. Forward gates live in lanes
    # [0, 3*Hp), backward gates in [3*Hp, 6*Hp). The r/z biases
    # (b_ih + b_hh) are pre-folded into b_in; the n-gate b_ih is folded,
    # b_hh_n is kept separate (it must stay inside r * (...)).
    gx_all = (jnp.dot(x_ref[...], w_in_ref[...],
                      preferred_element_type=jnp.float32)
              + b_in_ref[...])                               # (T*Bp, 6*Hp)

    whh = whh_ref[...]                                       # (Hp, 3*Hp)
    bhh_nf = jnp.broadcast_to(bhh_nf_ref[...], (Bp, Hp))     # hoisted broadcast
    bhh_nb = jnp.broadcast_to(bhh_nb_ref[...], (Bp, Hp))

    # Forward recurrence. T is small and static -> fully unrolled so the
    # per-step MXU push, EUP sigmoid/tanh and VPU blends can interleave.
    # Padded hidden lanes [H, Hp) provably stay 0 across steps (zero-padded
    # weights/biases), so padding never leaks into the real lanes.
    h = jnp.zeros((Bp, Hp), jnp.float32)
    for t in range(T):
        gx = gx_all[t * Bp:(t + 1) * Bp, :]                  # static, aligned slice
        gh = jnp.dot(h, whh, preferred_element_type=jnp.float32)   # (Bp, 3*Hp)
        r = jax.nn.sigmoid(gx[:, 0:Hp] + gh[:, 0:Hp])
        z = jax.nn.sigmoid(gx[:, Hp:2 * Hp] + gh[:, Hp:2 * Hp])
        n = jnp.tanh(gx[:, 2 * Hp:3 * Hp] + r * (gh[:, 2 * Hp:3 * Hp] + bhh_nf))
        h = (1.0 - z) * n + z * h

    # Backward direction of out[-1]: a single GRU step on x[T-1] from zero
    # state. h0 == 0 makes the recurrent matmul a no-op, so only the already
    # computed input projection is needed (r/z recurrent biases pre-folded).
    gxb = gx_all[(T - 1) * Bp:T * Bp, 3 * Hp:6 * Hp]          # (Bp, 3*Hp)
    rb = jax.nn.sigmoid(gxb[:, 0:Hp])
    zb = jax.nn.sigmoid(gxb[:, Hp:2 * Hp])
    nb = jnp.tanh(gxb[:, 2 * Hp:3 * Hp] + rb * bhh_nb)
    h_bwd = (1.0 - zb) * nb

    # Final Linear on [h_fwd | h_bwd]; two dots avoid a lane-dim concat.
    # Output tile is (Bp, Ep) = (8, 128): lane-dense, unmasked stores.
    out_ref[...] = (jnp.dot(h, wlin_f_ref[...],
                            preferred_element_type=jnp.float32)
                    + jnp.dot(h_bwd, wlin_b_ref[...],
                              preferred_element_type=jnp.float32)
                    + blin_ref[...])


def _round_up(n, m):
    return (n + m - 1) // m * m


def _pad_gate_cols(w, H, Hp):
    """(rows, 3H) -> (rows, 3*Hp): each gate zero-padded to Hp lanes."""
    parts = []
    for g in range(3):
        p = w[:, g * H:(g + 1) * H]
        parts.append(jnp.pad(p, ((0, 0), (0, Hp - H))))
    return jnp.concatenate(parts, axis=1)


def _pack_params(params, H, E):
    """Fold biases, pad gates/lanes, pre-transpose for the kernel."""
    Hp = _round_up(max(H, _LANE), _LANE)
    Ep = _round_up(max(E, _LANE), _LANE)

    def fold_rz_bias(bih, bhh):
        # b_ih (all gates) + b_hh (r/z gates only) go into the hoisted gx.
        zeros_n = jnp.zeros((1, H), jnp.float32)
        return bih + jnp.concatenate([bhh[:, :H], bhh[:, H:2 * H], zeros_n], 1)

    w_in = jnp.concatenate([_pad_gate_cols(params["wih_f"], H, Hp),
                            _pad_gate_cols(params["wih_b"], H, Hp)], axis=1)
    b_in = jnp.concatenate(
        [_pad_gate_cols(fold_rz_bias(params["bih_f"], params["bhh_f"]), H, Hp),
         _pad_gate_cols(fold_rz_bias(params["bih_b"], params["bhh_b"]), H, Hp)],
        axis=1)

    whh = _pad_gate_cols(params["whh_f"], H, Hp)              # (H, 3*Hp)
    whh = jnp.pad(whh, ((0, Hp - H), (0, 0)))                 # (Hp, 3*Hp)

    bhh_nf = jnp.pad(params["bhh_f"][:, 2 * H:], ((0, 0), (0, Hp - H)))
    bhh_nb = jnp.pad(params["bhh_b"][:, 2 * H:], ((0, 0), (0, Hp - H)))

    wlin = params["wlin"]                                     # (2H, E)
    wlin_f = jnp.pad(wlin[:H], ((0, Hp - H), (0, Ep - E)))    # (Hp, Ep)
    wlin_b = jnp.pad(wlin[H:], ((0, Hp - H), (0, Ep - E)))    # (Hp, Ep)
    blin = jnp.pad(params["blin"], ((0, 0), (0, Ep - E)))     # (1, Ep)

    return (w_in, b_in, whh, bhh_nf, bhh_nb, wlin_f, wlin_b, blin), Hp, Ep


@functools.partial(jax.jit)
def rnn_encoder_forward(x, params):
    """x: (B, C, T) float32, exactly like the PyTorch module's input."""
    B, C, T = x.shape
    H = params["whh_f"].shape[0]
    E = params["wlin"].shape[1]

    packed, Hp, Ep = _pack_params(params, H, E)
    Bp = _round_up(max(B, _SUBLANE), _SUBLANE)

    # (B, C, T) -> (T, Bp, C) -> (T*Bp, C); batch padded to a sublane multiple.
    # TODO(synk): at these toy sizes the transpose copy is negligible; for
    # realistic sizes compute gx_all in the wrapper via dot_general on C.
    x_tbc = jnp.transpose(x, (2, 0, 1)).astype(jnp.float32)
    x_tbc = jnp.pad(x_tbc, ((0, 0), (0, Bp - B), (0, 0)))
    x_flat = x_tbc.reshape(T * Bp, C)

    vmem = pl.BlockSpec(memory_space=pltpu.MemorySpace.VMEM)
    out = pl.pallas_call(
        rnn_encoder_kernel,
        out_shape=jax.ShapeDtypeStruct((Bp, Ep), jnp.float32),
        in_specs=[vmem] * (1 + len(packed)),
        out_specs=vmem,
    )(x_flat, *packed)
    return out[:B, :E]


def make_params(key, in_channel, hidden, encoding):
    """Deterministic synthetic parameters matching torch.nn.GRU/Linear shapes.

    torch stores weight_ih_l0:(3H,C), weight_hh_l0:(3H,H), biases:(3H,),
    nn.Linear weight:(E,2H), bias:(E,). Kept pre-transposed ((in,3H)/(H,3H)/
    (2H,E)) with 2D biases; padding/folding for the kernel happens in the
    wrapper.
    """
    ks = jax.random.split(key, 11)
    s = 1.0 / jnp.sqrt(hidden)
    u = lambda k, shape: jax.random.uniform(k, shape, jnp.float32, -s, s)
    return {
        "wih_f": u(ks[0], (in_channel, 3 * hidden)),   # W_ih^T forward
        "whh_f": u(ks[1], (hidden, 3 * hidden)),       # W_hh^T forward
        "bih_f": u(ks[2], (1, 3 * hidden)),
        "bhh_f": u(ks[3], (1, 3 * hidden)),
        "wih_b": u(ks[4], (in_channel, 3 * hidden)),   # reverse direction
        "whh_b": u(ks[5], (hidden, 3 * hidden)),
        "bih_b": u(ks[6], (1, 3 * hidden)),
        "bhh_b": u(ks[7], (1, 3 * hidden)),
        "wlin": u(ks[8], (2 * hidden, encoding)),      # Linear weight^T
        "blin": u(ks[9], (1, encoding)),
    }


def rnn_encoder_reference(x, params):
    """Pure-JAX reference (mirrors torch GRU equations) for validation."""
    B, C, T = x.shape
    H = params["whh_f"].shape[0]
    x_tbc = jnp.transpose(x, (2, 0, 1)).astype(jnp.float32)

    def step(h, x_t, wih, whh, bih, bhh):
        gx = x_t @ wih + bih
        gh = h @ whh + bhh
        r = jax.nn.sigmoid(gx[:, :H] + gh[:, :H])
        z = jax.nn.sigmoid(gx[:, H:2 * H] + gh[:, H:2 * H])
        n = jnp.tanh(gx[:, 2 * H:] + r * gh[:, 2 * H:])
        return (1.0 - z) * n + z * h

    h = jnp.zeros((B, H), jnp.float32)
    for t in range(T):
        h = step(h, x_tbc[t], params["wih_f"], params["whh_f"],
                 params["bih_f"], params["bhh_f"])
    h_bwd = step(jnp.zeros((B, H), jnp.float32), x_tbc[T - 1],
                 params["wih_b"], params["whh_b"],
                 params["bih_b"], params["bhh_b"])
    out_last = jnp.concatenate([h, h_bwd], axis=-1)
    return out_last @ params["wlin"] + params["blin"]


if __name__ == "__main__":
    B, C, T = 2, 4, 8          # batch, in_channel, seq_len
    HIDDEN, ENC = 32, 16       # hidden_size, encoding_size

    key = jax.random.PRNGKey(0)
    kx, kp = jax.random.split(key)
    x = jax.random.normal(kx, (B, C, T), jnp.float32)
    params = make_params(kp, C, HIDDEN, ENC)

    enc = rnn_encoder_forward(x, params)
    enc = jax.block_until_ready(enc)

    ref = rnn_encoder_reference(x, params)
    assert enc.shape == (B, ENC)
    assert jnp.allclose(enc, ref, atol=2e-5, rtol=2e-5), "mismatch vs reference"

    print("KERNEL_OK")
</pallas_src>

<mosaic_0001>
module attributes {stable_mosaic.version = 11 : i64} {
  func.func @rnn_encoder_kernel(%arg0: memref<64x4xf32, #tpu.memory_space<vmem>>, %arg1: memref<4x768xf32, #tpu.memory_space<vmem>>, %arg2: memref<1x768xf32, #tpu.memory_space<vmem>>, %arg3: memref<128x384xf32, #tpu.memory_space<vmem>>, %arg4: memref<1x128xf32, #tpu.memory_space<vmem>>, %arg5: memref<1x128xf32, #tpu.memory_space<vmem>>, %arg6: memref<128x128xf32, #tpu.memory_space<vmem>>, %arg7: memref<128x128xf32, #tpu.memory_space<vmem>>, %arg8: memref<1x128xf32, #tpu.memory_space<vmem>>, %arg9: memref<8x128xf32, #tpu.memory_space<vmem>>) attributes {dimension_semantics = [], scalar_prefetch = 0 : i64, scratch_operands = 0 : i64, tpu.core_type = #tpu.core_type<tc>} {
    %c0 = arith.constant 0 : index
    %c0_0 = arith.constant 0 : index
    %0 = vector.load %arg0[%c0, %c0_0] : memref<64x4xf32, #tpu.memory_space<vmem>>, vector<64x4xf32>
    %c0_1 = arith.constant 0 : index
    %c0_2 = arith.constant 0 : index
    %1 = vector.load %arg1[%c0_1, %c0_2] : memref<4x768xf32, #tpu.memory_space<vmem>>, vector<4x768xf32>
    %cst = arith.constant dense<0.000000e+00> : vector<64x768xf32>
    %2 = tpu.matmul %0, %1, %cst {dimension_numbers = #tpu.dot_dimension_numbers<[1], [0], [0], [1], [0, 0, 1, 1], [], []>} : vector<64x4xf32>, vector<4x768xf32>, vector<64x768xf32> -> vector<64x768xf32>
    %c0_3 = arith.constant 0 : index
    %c0_4 = arith.constant 0 : index
    %3 = vector.load %arg2[%c0_3, %c0_4] : memref<1x768xf32, #tpu.memory_space<vmem>>, vector<1x768xf32>
    %4 = vector.broadcast %3 : vector<1x768xf32> to vector<64x768xf32>
    %5 = arith.addf %2, %4 : vector<64x768xf32>
    %c0_5 = arith.constant 0 : index
    %c0_6 = arith.constant 0 : index
    %6 = vector.load %arg3[%c0_5, %c0_6] : memref<128x384xf32, #tpu.memory_space<vmem>>, vector<128x384xf32>
    %c0_7 = arith.constant 0 : index
    %c0_8 = arith.constant 0 : index
    %7 = vector.load %arg4[%c0_7, %c0_8] : memref<1x128xf32, #tpu.memory_space<vmem>>, vector<1x128xf32>
    %8 = vector.shape_cast %7 : vector<1x128xf32> to vector<1x128xf32>
    %9 = vector.broadcast %8 : vector<1x128xf32> to vector<8x128xf32>
    %c0_9 = arith.constant 0 : index
    %c0_10 = arith.constant 0 : index
    %10 = vector.load %arg5[%c0_9, %c0_10] : memref<1x128xf32, #tpu.memory_space<vmem>>, vector<1x128xf32>
    %11 = vector.shape_cast %10 : vector<1x128xf32> to vector<1x128xf32>
    %12 = vector.broadcast %11 : vector<1x128xf32> to vector<8x128xf32>
    %cst_11 = arith.constant 0.000000e+00 : f32
    %13 = vector.broadcast %cst_11 : f32 to vector<8x128xf32>
    %14 = vector.extract_strided_slice %5 {offsets = [0, 0], sizes = [8, 768], strides = [1, 1]} : vector<64x768xf32> to vector<8x768xf32>
    %cst_12 = arith.constant dense<0.000000e+00> : vector<8x384xf32>
    %15 = tpu.matmul %13, %6, %cst_12 {dimension_numbers = #tpu.dot_dimension_numbers<[1], [0], [0], [1], [0, 0, 1, 1], [], []>} : vector<8x128xf32>, vector<128x384xf32>, vector<8x384xf32> -> vector<8x384xf32>
    %16 = vector.extract_strided_slice %14 {offsets = [0, 0], sizes = [8, 128], strides = [1, 1]} : vector<8x768xf32> to vector<8x128xf32>
    %17 = vector.extract_strided_slice %15 {offsets = [0, 0], sizes = [8, 128], strides = [1, 1]} : vector<8x384xf32> to vector<8x128xf32>
    %18 = arith.addf %16, %17 : vector<8x128xf32>
    %19 = arith.negf %18 : vector<8x128xf32>
    %20 = math.exp %19 : vector<8x128xf32>
    %cst_13 = arith.constant 1.000000e+00 : f32
    %21 = vector.broadcast %cst_13 : f32 to vector<8x128xf32>
    %22 = arith.addf %21, %20 : vector<8x128xf32>
    %23 = arith.divf %21, %22 : vector<8x128xf32>
    %24 = vector.extract_strided_slice %14 {offsets = [0, 128], sizes = [8, 128], strides = [1, 1]} : vector<8x768xf32> to vector<8x128xf32>
    %25 = vector.extract_strided_slice %15 {offsets = [0, 128], sizes = [8, 128], strides = [1, 1]} : vector<8x384xf32> to vector<8x128xf32>
    %26 = arith.addf %24, %25 : vector<8x128xf32>
    %27 = arith.negf %26 : vector<8x128xf32>
    %28 = math.exp %27 : vector<8x128xf32>
    %cst_14 = arith.constant 1.000000e+00 : f32
    %29 = vector.broadcast %cst_14 : f32 to vector<8x128xf32>
    %30 = arith.addf %29, %28 : vector<8x128xf32>
    %31 = arith.divf %29, %30 : vector<8x128xf32>
    %32 = vector.extract_strided_slice %14 {offsets = [0, 256], sizes = [8, 128], strides = [1, 1]} : vector<8x768xf32> to vector<8x128xf32>
    %33 = vector.extract_strided_slice %15 {offsets = [0, 256], sizes = [8, 128], strides = [1, 1]} : vector<8x384xf32> to vector<8x128xf32>
    %34 = arith.addf %33, %9 : vector<8x128xf32>
    %35 = arith.mulf %23, %34 : vector<8x128xf32>
    %36 = arith.addf %32, %35 : vector<8x128xf32>
    %37 = math.tanh %36 : vector<8x128xf32>
    %cst_15 = arith.constant 1.000000e+00 : f32
    %38 = vector.broadcast %cst_15 : f32 to vector<8x128xf32>
    %39 = arith.subf %38, %31 : vector<8x128xf32>
    %40 = arith.mulf %39, %37 : vector<8x128xf32>
    %41 = arith.mulf %31, %13 : vector<8x128xf32>
    %42 = arith.addf %40, %41 : vector<8x128xf32>
    %43 = vector.extract_strided_slice %5 {offsets = [8, 0], sizes = [8, 768], strides = [1, 1]} : vector<64x768xf32> to vector<8x768xf32>
    %cst_16 = arith.constant dense<0.000000e+00> : vector<8x384xf32>
    %44 = tpu.matmul %42, %6, %cst_16 {dimension_numbers = #tpu.dot_dimension_numbers<[1], [0], [0], [1], [0, 0, 1, 1], [], []>} : vector<8x128xf32>, vector<128x384xf32>, vector<8x384xf32> -> vector<8x384xf32>
    %45 = vector.extract_strided_slice %43 {offsets = [0, 0], sizes = [8, 128], strides = [1, 1]} : vector<8x768xf32> to vector<8x128xf32>
    %46 = vector.extract_strided_slice %44 {offsets = [0, 0], sizes = [8, 128], strides = [1, 1]} : vector<8x384xf32> to vector<8x128xf32>
    %47 = arith.addf %45, %46 : vector<8x128xf32>
    %48 = arith.negf %47 : vector<8x128xf32>
    %49 = math.exp %48 : vector<8x128xf32>
    %cst_17 = arith.constant 1.000000e+00 : f32
    %50 = vector.broadcast %cst_17 : f32 to vector<8x128xf32>
    %51 = arith.addf %50, %49 : vector<8x128xf32>
    %52 = arith.divf %50, %51 : vector<8x128xf32>
    %53 = vector.extract_strided_slice %43 {offsets = [0, 128], sizes = [8, 128], strides = [1, 1]} : vector<8x768xf32> to vector<8x128xf32>
    %54 = vector.extract_strided_slice %44 {offsets = [0, 128], sizes = [8, 128], strides = [1, 1]} : vector<8x384xf32> to vector<8x128xf32>
    %55 = arith.addf %53, %54 : vector<8x128xf32>
    %56 = arith.negf %55 : vector<8x128xf32>
    %57 = math.exp %56 : vector<8x128xf32>
    %cst_18 = arith.constant 1.000000e+00 : f32
    %58 = vector.broadcast %cst_18 : f32 to vector<8x128xf32>
    %59 = arith.addf %58, %57 : vector<8x128xf32>
    %60 = arith.divf %58, %59 : vector<8x128xf32>
    %61 = vector.extract_strided_slice %43 {offsets = [0, 256], sizes = [8, 128], strides = [1, 1]} : vector<8x768xf32> to vector<8x128xf32>
    %62 = vector.extract_strided_slice %44 {offsets = [0, 256], sizes = [8, 128], strides = [1, 1]} : vector<8x384xf32> to vector<8x128xf32>
    %63 = arith.addf %62, %9 : vector<8x128xf32>
    %64 = arith.mulf %52, %63 : vector<8x128xf32>
    %65 = arith.addf %61, %64 : vector<8x128xf32>
    %66 = math.tanh %65 : vector<8x128xf32>
    %cst_19 = arith.constant 1.000000e+00 : f32
    %67 = vector.broadcast %cst_19 : f32 to vector<8x128xf32>
    %68 = arith.subf %67, %60 : vector<8x128xf32>
    %69 = arith.mulf %68, %66 : vector<8x128xf32>
    %70 = arith.mulf %60, %42 : vector<8x128xf32>
    %71 = arith.addf %69, %70 : vector<8x128xf32>
    %72 = vector.extract_strided_slice %5 {offsets = [16, 0], sizes = [8, 768], strides = [1, 1]} : vector<64x768xf32> to vector<8x768xf32>
    %cst_20 = arith.constant dense<0.000000e+00> : vector<8x384xf32>
    %73 = tpu.matmul %71, %6, %cst_20 {dimension_numbers = #tpu.dot_dimension_numbers<[1], [0], [0], [1], [0, 0, 1, 1], [], []>} : vector<8x128xf32>, vector<128x384xf32>, vector<8x384xf32> -> vector<8x384xf32>
    %74 = vector.extract_strided_slice %72 {offsets = [0, 0], sizes = [8, 128], strides = [1, 1]} : vector<8x768xf32> to vector<8x128xf32>
    %75 = vector.extract_strided_slice %73 {offsets = [0, 0], sizes = [8, 128], strides = [1, 1]} : vector<8x384xf32> to vector<8x128xf32>
    %76 = arith.addf %74, %75 : vector<8x128xf32>
    %77 = arith.negf %76 : vector<8x128xf32>
    %78 = math.exp %77 : vector<8x128xf32>
    %cst_21 = arith.constant 1.000000e+00 : f32
    %79 = vector.broadcast %cst_21 : f32 to vector<8x128xf32>
    %80 = arith.addf %79, %78 : vector<8x128xf32>
    %81 = arith.divf %79, %80 : vector<8x128xf32>
    %82 = vector.extract_strided_slice %72 {offsets = [0, 128], sizes = [8, 128], strides = [1, 1]} : vector<8x768xf32> to vector<8x128xf32>
    %83 = vector.extract_strided_slice %73 {offsets = [0, 128], sizes = [8, 128], strides = [1, 1]} : vector<8x384xf32> to vector<8x128xf32>
    %84 = arith.addf %82, %83 : vector<8x128xf32>
    %85 = arith.negf %84 : vector<8x128xf32>
    %86 = math.exp %85 : vector<8x128xf32>
    %cst_22 = arith.constant 1.000000e+00 : f32
    %87 = vector.broadcast %cst_22 : f32 to vector<8x128xf32>
    %88 = arith.addf %87, %86 : vector<8x128xf32>
    %89 = arith.divf %87, %88 : vector<8x128xf32>
    %90 = vector.extract_strided_slice %72 {offsets = [0, 256], sizes = [8, 128], strides = [1, 1]} : vector<8x768xf32> to vector<8x128xf32>
    %91 = vector.extract_strided_slice %73 {offsets = [0, 256], sizes = [8, 128], strides = [1, 1]} : vector<8x384xf32> to vector<8x128xf32>
    %92 = arith.addf %91, %9 : vector<8x128xf32>
    %93 = arith.mulf %81, %92 : vector<8x128xf32>
    %94 = arith.addf %90, %93 : vector<8x128xf32>
    %95 = math.tanh %94 : vector<8x128xf32>
    %cst_23 = arith.constant 1.000000e+00 : f32
    %96 = vector.broadcast %cst_23 : f32 to vector<8x128xf32>
    %97 = arith.subf %96, %89 : vector<8x128xf32>
    %98 = arith.mulf %97, %95 : vector<8x128xf32>
    %99 = arith.mulf %89, %71 : vector<8x128xf32>
    %100 = arith.addf %98, %99 : vector<8x128xf32>
    %101 = vector.extract_strided_slice %5 {offsets = [24, 0], sizes = [8, 768], strides = [1, 1]} : vector<64x768xf32> to vector<8x768xf32>
    %cst_24 = arith.constant dense<0.000000e+00> : vector<8x384xf32>
    %102 = tpu.matmul %100, %6, %cst_24 {dimension_numbers = #tpu.dot_dimension_numbers<[1], [0], [0], [1], [0, 0, 1, 1], [], []>} : vector<8x128xf32>, vector<128x384xf32>, vector<8x384xf32> -> vector<8x384xf32>
    %103 = vector.extract_strided_slice %101 {offsets = [0, 0], sizes = [8, 128], strides = [1, 1]} : vector<8x768xf32> to vector<8x128xf32>
    %104 = vector.extract_strided_slice %102 {offsets = [0, 0], sizes = [8, 128], strides = [1, 1]} : vector<8x384xf32> to vector<8x128xf32>
    %105 = arith.addf %103, %104 : vector<8x128xf32>
    %106 = arith.negf %105 : vector<8x128xf32>
    %107 = math.exp %106 : vector<8x128xf32>
    %cst_25 = arith.constant 1.000000e+00 : f32
    %108 = vector.broadcast %cst_25 : f32 to vector<8x128xf32>
    %109 = arith.addf %108, %107 : vector<8x128xf32>
    %110 = arith.divf %108, %109 : vector<8x128xf32>
    %111 = vector.extract_strided_slice %101 {offsets = [0, 128], sizes = [8, 128], strides = [1, 1]} : vector<8x768xf32> to vector<8x128xf32>
    %112 = vector.extract_strided_slice %102 {offsets = [0, 128], sizes = [8, 128], strides = [1, 1]} : vector<8x384xf32> to vector<8x128xf32>
    %113 = arith.addf %111, %112 : vector<8x128xf32>
    %114 = arith.negf %113 : vector<8x128xf32>
    %115 = math.exp %114 : vector<8x128xf32>
    %cst_26 = arith.constant 1.000000e+00 : f32
    %116 = vector.broadcast %cst_26 : f32 to vector<8x128xf32>
    %117 = arith.addf %116, %115 : vector<8x128xf32>
    %118 = arith.divf %116, %117 : vector<8x128xf32>
    %119 = vector.extract_strided_slice %101 {offsets = [0, 256], sizes = [8, 128], strides = [1, 1]} : vector<8x768xf32> to vector<8x128xf32>
    %120 = vector.extract_strided_slice %102 {offsets = [0, 256], sizes = [8, 128], strides = [1, 1]} : vector<8x384xf32> to vector<8x128xf32>
    %121 = arith.addf %120, %9 : vector<8x128xf32>
    %122 = arith.mulf %110, %121 : vector<8x128xf32>
    %123 = arith.addf %119, %122 : vector<8x128xf32>
    %124 = math.tanh %123 : vector<8x128xf32>
    %cst_27 = arith.constant 1.000000e+00 : f32
    %125 = vector.broadcast %cst_27 : f32 to vector<8x128xf32>
    %126 = arith.subf %125, %118 : vector<8x128xf32>
    %127 = arith.mulf %126, %124 : vector<8x128xf32>
    %128 = arith.mulf %118, %100 : vector<8x128xf32>
    %129 = arith.addf %127, %128 : vector<8x128xf32>
    %130 = vector.extract_strided_slice %5 {offsets = [32, 0], sizes = [8, 768], strides = [1, 1]} : vector<64x768xf32> to vector<8x768xf32>
    %cst_28 = arith.constant dense<0.000000e+00> : vector<8x384xf32>
    %131 = tpu.matmul %129, %6, %cst_28 {dimension_numbers = #tpu.dot_dimension_numbers<[1], [0], [0], [1], [0, 0, 1, 1], [], []>} : vector<8x128xf32>, vector<128x384xf32>, vector<8x384xf32> -> vector<8x384xf32>
    %132 = vector.extract_strided_slice %130 {offsets = [0, 0], sizes = [8, 128], strides = [1, 1]} : vector<8x768xf32> to vector<8x128xf32>
    %133 = vector.extract_strided_slice %131 {offsets = [0, 0], sizes = [8, 128], strides = [1, 1]} : vector<8x384xf32> to vector<8x128xf32>
    %134 = arith.addf %132, %133 : vector<8x128xf32>
    %135 = arith.negf %134 : vector<8x128xf32>
    %136 = math.exp %135 : vector<8x128xf32>
    %cst_29 = arith.constant 1.000000e+00 : f32
    %137 = vector.broadcast %cst_29 : f32 to vector<8x128xf32>
    %138 = arith.addf %137, %136 : vector<8x128xf32>
    %139 = arith.divf %137, %138 : vector<8x128xf32>
    %140 = vector.extract_strided_slice %130 {offsets = [0, 128], sizes = [8, 128], strides = [1, 1]} : vector<8x768xf32> to vector<8x128xf32>
    %141 = vector.extract_strided_slice %131 {offsets = [0, 128], sizes = [8, 128], strides = [1, 1]} : vector<8x384xf32> to vector<8x128xf32>
    %142 = arith.addf %140, %141 : vector<8x128xf32>
    %143 = arith.negf %142 : vector<8x128xf32>
    %144 = math.exp %143 : vector<8x128xf32>
    %cst_30 = arith.constant 1.000000e+00 : f32
    %145 = vector.broadcast %cst_30 : f32 to vector<8x128xf32>
    %146 = arith.addf %145, %144 : vector<8x128xf32>
    %147 = arith.divf %145, %146 : vector<8x128xf32>
    %148 = vector.extract_strided_slice %130 {offsets = [0, 256], sizes = [8, 128], strides = [1, 1]} : vector<8x768xf32> to vector<8x128xf32>
    %149 = vector.extract_strided_slice %131 {offsets = [0, 256], sizes = [8, 128], strides = [1, 1]} : vector<8x384xf32> to vector<8x128xf32>
    %150 = arith.addf %149, %9 : vector<8x128xf32>
    %151 = arith.mulf %139, %150 : vector<8x128xf32>
    %152 = arith.addf %148, %151 : vector<8x128xf32>
    %153 = math.tanh %152 : vector<8x128xf32>
    %cst_31 = arith.constant 1.000000e+00 : f32
    %154 = vector.broadcast %cst_31 : f32 to vector<8x128xf32>
    %155 = arith.subf %154, %147 : vector<8x128xf32>
    %156 = arith.mulf %155, %153 : vector<8x128xf32>
    %157 = arith.mulf %147, %129 : vector<8x128xf32>
    %158 = arith.addf %156, %157 : vector<8x128xf32>
    %159 = vector.extract_strided_slice %5 {offsets = [40, 0], sizes = [8, 768], strides = [1, 1]} : vector<64x768xf32> to vector<8x768xf32>
    %cst_32 = arith.constant dense<0.000000e+00> : vector<8x384xf32>
    %160 = tpu.matmul %158, %6, %cst_32 {dimension_numbers = #tpu.dot_dimension_numbers<[1], [0], [0], [1], [0, 0, 1, 1], [], []>} : vector<8x128xf32>, vector<128x384xf32>, vector<8x384xf32> -> vector<8x384xf32>
    %161 = vector.extract_strided_slice %159 {offsets = [0, 0], sizes = [8, 128], strides = [1, 1]} : vector<8x768xf32> to vector<8x128xf32>
    %162 = vector.extract_strided_slice %160 {offsets = [0, 0], sizes = [8, 128], strides = [1, 1]} : vector<8x384xf32> to vector<8x128xf32>
    %163 = arith.addf %161, %162 : vector<8x128xf32>
    %164 = arith.negf %163 : vector<8x128xf32>
    %165 = math.exp %164 : vector<8x128xf32>
    %cst_33 = arith.constant 1.000000e+00 : f32
    %166 = vector.broadcast %cst_33 : f32 to vector<8x128xf32>
    %167 = arith.addf %166, %165 : vector<8x128xf32>
    %168 = arith.divf %166, %167 : vector<8x128xf32>
    %169 = vector.extract_strided_slice %159 {offsets = [0, 128], sizes = [8, 128], strides = [1, 1]} : vector<8x768xf32> to vector<8x128xf32>
    %170 = vector.extract_strided_slice %160 {offsets = [0, 128], sizes = [8, 128], strides = [1, 1]} : vector<8x384xf32> to vector<8x128xf32>
    %171 = arith.addf %169, %170 : vector<8x128xf32>
    %172 = arith.negf %171 : vector<8x128xf32>
    %173 = math.exp %172 : vector<8x128xf32>
    %cst_34 = arith.constant 1.000000e+00 : f32
    %174 = vector.broadcast %cst_34 : f32 to vector<8x128xf32>
    %175 = arith.addf %174, %173 : vector<8x128xf32>
    %176 = arith.divf %174, %175 : vector<8x128xf32>
    %177 = vector.extract_strided_slice %159 {offsets = [0, 256], sizes = [8, 128], strides = [1, 1]} : vector<8x768xf32> to vector<8x128xf32>
    %178 = vector.extract_strided_slice %160 {offsets = [0, 256], sizes = [8, 128], strides = [1, 1]} : vector<8x384xf32> to vector<8x128xf32>
    %179 = arith.addf %178, %9 : vector<8x128xf32>
    %180 = arith.mulf %168, %179 : vector<8x128xf32>
    %181 = arith.addf %177, %180 : vector<8x128xf32>
    %182 = math.tanh %181 : vector<8x128xf32>
    %cst_35 = arith.constant 1.000000e+00 : f32
    %183 = vector.broadcast %cst_35 : f32 to vector<8x128xf32>
    %184 = arith.subf %183, %176 : vector<8x128xf32>
    %185 = arith.mulf %184, %182 : vector<8x128xf32>
    %186 = arith.mulf %176, %158 : vector<8x128xf32>
    %187 = arith.addf %185, %186 : vector<8x128xf32>
    %188 = vector.extract_strided_slice %5 {offsets = [48, 0], sizes = [8, 768], strides = [1, 1]} : vector<64x768xf32> to vector<8x768xf32>
    %cst_36 = arith.constant dense<0.000000e+00> : vector<8x384xf32>
    %189 = tpu.matmul %187, %6, %cst_36 {dimension_numbers = #tpu.dot_dimension_numbers<[1], [0], [0], [1], [0, 0, 1, 1], [], []>} : vector<8x128xf32>, vector<128x384xf32>, vector<8x384xf32> -> vector<8x384xf32>
    %190 = vector.extract_strided_slice %188 {offsets = [0, 0], sizes = [8, 128], strides = [1, 1]} : vector<8x768xf32> to vector<8x128xf32>
    %191 = vector.extract_strided_slice %189 {offsets = [0, 0], sizes = [8, 128], strides = [1, 1]} : vector<8x384xf32> to vector<8x128xf32>
    %192 = arith.addf %190, %191 : vector<8x128xf32>
    %193 = arith.negf %192 : vector<8x128xf32>
    %194 = math.exp %193 : vector<8x128xf32>
    %cst_37 = arith.constant 1.000000e+00 : f32
    %195 = vector.broadcast %cst_37 : f32 to vector<8x128xf32>
    %196 = arith.addf %195, %194 : vector<8x128xf32>
    %197 = arith.divf %195, %196 : vector<8x128xf32>
    %198 = vector.extract_strided_slice %188 {offsets = [0, 128], sizes = [8, 128], strides = [1, 1]} : vector<8x768xf32> to vector<8x128xf32>
    %199 = vector.extract_strided_slice %189 {offsets = [0, 128], sizes = [8, 128], strides = [1, 1]} : vector<8x384xf32> to vector<8x128xf32>
    %200 = arith.addf %198, %199 : vector<8x128xf32>
    %201 = arith.negf %200 : vector<8x128xf32>
    %202 = math.exp %201 : vector<8x128xf32>
    %cst_38 = arith.constant 1.000000e+00 : f32
    %203 = vector.broadcast %cst_38 : f32 to vector<8x128xf32>
    %204 = arith.addf %203, %202 : vector<8x128xf32>
    %205 = arith.divf %203, %204 : vector<8x128xf32>
    %206 = vector.extract_strided_slice %188 {offsets = [0, 256], sizes = [8, 128], strides = [1, 1]} : vector<8x768xf32> to vector<8x128xf32>
    %207 = vector.extract_strided_slice %189 {offsets = [0, 256], sizes = [8, 128], strides = [1, 1]} : vector<8x384xf32> to vector<8x128xf32>
    %208 = arith.addf %207, %9 : vector<8x128xf32>
    %209 = arith.mulf %197, %208 : vector<8x128xf32>
    %210 = arith.addf %206, %209 : vector<8x128xf32>
    %211 = math.tanh %210 : vector<8x128xf32>
    %cst_39 = arith.constant 1.000000e+00 : f32
    %212 = vector.broadcast %cst_39 : f32 to vector<8x128xf32>
    %213 = arith.subf %212, %205 : vector<8x128xf32>
    %214 = arith.mulf %213, %211 : vector<8x128xf32>
    %215 = arith.mulf %205, %187 : vector<8x128xf32>
    %216 = arith.addf %214, %215 : vector<8x128xf32>
    %217 = vector.extract_strided_slice %5 {offsets = [56, 0], sizes = [8, 768], strides = [1, 1]} : vector<64x768xf32> to vector<8x768xf32>
    %cst_40 = arith.constant dense<0.000000e+00> : vector<8x384xf32>
    %218 = tpu.matmul %216, %6, %cst_40 {dimension_numbers = #tpu.dot_dimension_numbers<[1], [0], [0], [1], [0, 0, 1, 1], [], []>} : vector<8x128xf32>, vector<128x384xf32>, vector<8x384xf32> -> vector<8x384xf32>
    %219 = vector.extract_strided_slice %217 {offsets = [0, 0], sizes = [8, 128], strides = [1, 1]} : vector<8x768xf32> to vector<8x128xf32>
    %220 = vector.extract_strided_slice %218 {offsets = [0, 0], sizes = [8, 128], strides = [1, 1]} : vector<8x384xf32> to vector<8x128xf32>
    %221 = arith.addf %219, %220 : vector<8x128xf32>
    %222 = arith.negf %221 : vector<8x128xf32>
    %223 = math.exp %222 : vector<8x128xf32>
    %cst_41 = arith.constant 1.000000e+00 : f32
    %224 = vector.broadcast %cst_41 : f32 to vector<8x128xf32>
    %225 = arith.addf %224, %223 : vector<8x128xf32>
    %226 = arith.divf %224, %225 : vector<8x128xf32>
    %227 = vector.extract_strided_slice %217 {offsets = [0, 128], sizes = [8, 128], strides = [1, 1]} : vector<8x768xf32> to vector<8x128xf32>
    %228 = vector.extract_strided_slice %218 {offsets = [0, 128], sizes = [8, 128], strides = [1, 1]} : vector<8x384xf32> to vector<8x128xf32>
    %229 = arith.addf %227, %228 : vector<8x128xf32>
    %230 = arith.negf %229 : vector<8x128xf32>
    %231 = math.exp %230 : vector<8x128xf32>
    %cst_42 = arith.constant 1.000000e+00 : f32
    %232 = vector.broadcast %cst_42 : f32 to vector<8x128xf32>
    %233 = arith.addf %232, %231 : vector<8x128xf32>
    %234 = arith.divf %232, %233 : vector<8x128xf32>
    %235 = vector.extract_strided_slice %217 {offsets = [0, 256], sizes = [8, 128], strides = [1, 1]} : vector<8x768xf32> to vector<8x128xf32>
    %236 = vector.extract_strided_slice %218 {offsets = [0, 256], sizes = [8, 128], strides = [1, 1]} : vector<8x384xf32> to vector<8x128xf32>
    %237 = arith.addf %236, %9 : vector<8x128xf32>
    %238 = arith.mulf %226, %237 : vector<8x128xf32>
    %239 = arith.addf %235, %238 : vector<8x128xf32>
    %240 = math.tanh %239 : vector<8x128xf32>
    %cst_43 = arith.constant 1.000000e+00 : f32
    %241 = vector.broadcast %cst_43 : f32 to vector<8x128xf32>
    %242 = arith.subf %241, %234 : vector<8x128xf32>
    %243 = arith.mulf %242, %240 : vector<8x128xf32>
    %244 = arith.mulf %234, %216 : vector<8x128xf32>
    %245 = arith.addf %243, %244 : vector<8x128xf32>
    %246 = vector.extract_strided_slice %5 {offsets = [56, 384], sizes = [8, 384], strides = [1, 1]} : vector<64x768xf32> to vector<8x384xf32>
    %247 = vector.extract_strided_slice %246 {offsets = [0, 0], sizes = [8, 128], strides = [1, 1]} : vector<8x384xf32> to vector<8x128xf32>
    %248 = arith.negf %247 : vector<8x128xf32>
    %249 = math.exp %248 : vector<8x128xf32>
    %cst_44 = arith.constant 1.000000e+00 : f32
    %250 = vector.broadcast %cst_44 : f32 to vector<8x128xf32>
    %251 = arith.addf %250, %249 : vector<8x128xf32>
    %252 = arith.divf %250, %251 : vector<8x128xf32>
    %253 = vector.extract_strided_slice %246 {offsets = [0, 128], sizes = [8, 128], strides = [1, 1]} : vector<8x384xf32> to vector<8x128xf32>
    %254 = arith.negf %253 : vector<8x128xf32>
    %255 = math.exp %254 : vector<8x128xf32>
    %cst_45 = arith.constant 1.000000e+00 : f32
    %256 = vector.broadcast %cst_45 : f32 to vector<8x128xf32>
    %257 = arith.addf %256, %255 : vector<8x128xf32>
    %258 = arith.divf %256, %257 : vector<8x128xf32>
    %259 = vector.extract_strided_slice %246 {offsets = [0, 256], sizes = [8, 128], strides = [1, 1]} : vector<8x384xf32> to vector<8x128xf32>
    %260 = arith.mulf %252, %12 : vector<8x128xf32>
    %261 = arith.addf %259, %260 : vector<8x128xf32>
    %262 = math.tanh %261 : vector<8x128xf32>
    %cst_46 = arith.constant 1.000000e+00 : f32
    %263 = vector.broadcast %cst_46 : f32 to vector<8x128xf32>
    %264 = arith.subf %263, %258 : vector<8x128xf32>
    %265 = arith.mulf %264, %262 : vector<8x128xf32>
    %c0_47 = arith.constant 0 : index
    %c0_48 = arith.constant 0 : index
    %266 = vector.load %arg6[%c0_47, %c0_48] : memref<128x128xf32, #tpu.memory_space<vmem>>, vector<128x128xf32>
    %cst_49 = arith.constant dense<0.000000e+00> : vector<8x128xf32>
    %267 = tpu.matmul %245, %266, %cst_49 {dimension_numbers = #tpu.dot_dimension_numbers<[1], [0], [0], [1], [0, 0, 1, 1], [], []>} : vector<8x128xf32>, vector<128x128xf32>, vector<8x128xf32> -> vector<8x128xf32>
    %c0_50 = arith.constant 0 : index
    %c0_51 = arith.constant 0 : index
    %268 = vector.load %arg7[%c0_50, %c0_51] : memref<128x128xf32, #tpu.memory_space<vmem>>, vector<128x128xf32>
    %cst_52 = arith.constant dense<0.000000e+00> : vector<8x128xf32>
    %269 = tpu.matmul %265, %268, %cst_52 {dimension_numbers = #tpu.dot_dimension_numbers<[1], [0], [0], [1], [0, 0, 1, 1], [], []>} : vector<8x128xf32>, vector<128x128xf32>, vector<8x128xf32> -> vector<8x128xf32>
    %270 = arith.addf %267, %269 : vector<8x128xf32>
    %c0_53 = arith.constant 0 : index
    %c0_54 = arith.constant 0 : index
    %271 = vector.load %arg8[%c0_53, %c0_54] : memref<1x128xf32, #tpu.memory_space<vmem>>, vector<1x128xf32>
    %272 = vector.broadcast %271 : vector<1x128xf32> to vector<8x128xf32>
    %273 = arith.addf %270, %272 : vector<8x128xf32>
    %c0_55 = arith.constant 0 : index
    %c0_56 = arith.constant 0 : index
    %274 = vector.load %arg9[%c0_55, %c0_56] : memref<8x128xf32, #tpu.memory_space<vmem>>, vector<8x128xf32>
    tpu.vector_store %arg9[%c0_55, %c0_56], %273 {strides = array<i32>} : memref<8x128xf32, #tpu.memory_space<vmem>>, vector<8x128xf32>,
    return
  }
}

</mosaic_0001>

<llo_original>
// kernel: rnn_encoder_forward.1
$region0: #{rnn_encoder_forward.1}
  #allocation0 [shape = 'u32[]', space=smem, size = 0x4, offset = 0x4, fixed_abs, tag = 'smem constant byte address 0x4 - core index']
  #allocation1 [shape = 'u32[144,128]{1,0:T(1,128)}', space=vmem, size = 0x12000, scoped, tag = 'internal scratch']
  %s0 = inlined_call_operand.vmem [shape: f32[64,4], index: 0, kind: input, shape index: {}]
  %s1 = inlined_call_operand.vmem [shape: f32[4,768], index: 1, kind: input, shape index: {}]
  %s2 = inlined_call_operand.vmem [shape: f32[1,768], index: 2, kind: input, shape index: {}]
  %s3 = inlined_call_operand.vmem [shape: f32[128,384], index: 3, kind: input, shape index: {}]
  %s4 = inlined_call_operand.vmem [shape: f32[1,128], index: 4, kind: input, shape index: {}]
  %s5 = inlined_call_operand.vmem [shape: f32[1,128], index: 5, kind: input, shape index: {}]
  %s6 = inlined_call_operand.vmem [shape: f32[128,128], index: 6, kind: input, shape index: {}]
  %s7 = inlined_call_operand.vmem [shape: f32[128,128], index: 7, kind: input, shape index: {}]
  %s8 = inlined_call_operand.vmem [shape: f32[1,128], index: 8, kind: input, shape index: {}]
  %s9 = inlined_call_operand.vmem [shape: f32[8,128], index: 9, kind: output, shape index: {}]
  %s10 = sld [smem:[#allocation0]]
  $region46: #{rnn_encoder_forward.1} parent=0
    _
  %s12 = ssub.s32 1, %s10
  %s13 = scalar_select 0, %s12, %s10
  // Predicated region
  $region2: #{rnn_encoder_forward.1} parent=0 // pred_check
    _
  $region3: #{rnn_encoder_forward.1} parent=0 // pred_check_branch
    %15 = sbr.rel (0) target = $region5
  $region4: #{rnn_encoder_forward.1} parent=0 // pred_region
    _
  $region5: #{rnn_encoder_forward.1} parent=0 // pred_fallthru
    _
  // Predicated region
  $region6: #{rnn_encoder_forward.1} parent=0 // pred_check
    _
  $region7: #{rnn_encoder_forward.1} parent=0 // pred_check_branch
    %17 = sbr.rel (0) target = $region9
  $region8: #{rnn_encoder_forward.1} parent=0 // pred_region
    _
  $region9: #{rnn_encoder_forward.1} parent=0 // pred_fallthru
    _
  // Predicated region
  $region10: #{rnn_encoder_forward.1} parent=0 // pred_check
    _
  $region11: #{rnn_encoder_forward.1} parent=0 // pred_check_branch
    %19 = sbr.rel (0) target = $region13
  $region12: #{rnn_encoder_forward.1} parent=0 // pred_region
    _
  $region13: #{rnn_encoder_forward.1} parent=0 // pred_fallthru
    _
  // Predicated region
  $region14: #{rnn_encoder_forward.1} parent=0 // pred_check
    _
  $region15: #{rnn_encoder_forward.1} parent=0 // pred_check_branch
    %21 = sbr.rel (0) target = $region17
  $region16: #{rnn_encoder_forward.1} parent=0 // pred_region
    _
  $region17: #{rnn_encoder_forward.1} parent=0 // pred_fallthru
    _
  // Predicated region
  $region18: #{rnn_encoder_forward.1} parent=0 // pred_check
    _
  $region19: #{rnn_encoder_forward.1} parent=0 // pred_check_branch
    %23 = sbr.rel (0) target = $region21
  $region20: #{rnn_encoder_forward.1} parent=0 // pred_region
    _
  $region21: #{rnn_encoder_forward.1} parent=0 // pred_fallthru
    _
  // Predicated region
  $region22: #{rnn_encoder_forward.1} parent=0 // pred_check
    _
  $region23: #{rnn_encoder_forward.1} parent=0 // pred_check_branch
    %25 = sbr.rel (0) target = $region25
  $region24: #{rnn_encoder_forward.1} parent=0 // pred_region
    _
  $region25: #{rnn_encoder_forward.1} parent=0 // pred_fallthru
    _
  // Predicated region
  $region26: #{rnn_encoder_forward.1} parent=0 // pred_check
    _
  $region27: #{rnn_encoder_forward.1} parent=0 // pred_check_branch
    %27 = sbr.rel (0) target = $region29
  $region28: #{rnn_encoder_forward.1} parent=0 // pred_region
    _
  $region29: #{rnn_encoder_forward.1} parent=0 // pred_fallthru
    _
  // Predicated region
  $region30: #{rnn_encoder_forward.1} parent=0 // pred_check
    _
  $region31: #{rnn_encoder_forward.1} parent=0 // pred_check_branch
    %29 = sbr.rel (0) target = $region33
  $region32: #{rnn_encoder_forward.1} parent=0 // pred_region
    _
  $region33: #{rnn_encoder_forward.1} parent=0 // pred_fallthru
    _
  // Predicated region
  $region34: #{rnn_encoder_forward.1} parent=0 // pred_check
    _
  $region35: #{rnn_encoder_forward.1} parent=0 // pred_check_branch
    %31 = sbr.rel (0) target = $region37
  $region36: #{rnn_encoder_forward.1} parent=0 // pred_region
    _
  $region37: #{rnn_encoder_forward.1} parent=0 // pred_fallthru
    _
  %v32 = vld [vmem:[%s0] sm:$0xff]
  %v33 = vld [vmem:[%s0 + $0x8] sm:$0xff]
  %v34 = vld [vmem:[%s0 + $0x10] sm:$0xff]
  %v35 = vld [vmem:[%s0 + $0x18] sm:$0xff]
  %v36 = vld [vmem:[%s0 + $0x20] sm:$0xff]
  %v37 = vld [vmem:[%s0 + $0x28] sm:$0xff]
  %v38 = vld [vmem:[%s0 + $0x30] sm:$0xff]
  %v39 = vld [vmem:[%s0 + $0x38] sm:$0xff]
  %v40 = vld [vmem:[%s1] sm:$0xff]
  %v41 = vld [vmem:[%s1 + $0x8] sm:$0xff]
  %v42 = vld [vmem:[%s1 + $0x10] sm:$0xff]
  %v43 = vld [vmem:[%s2] sm:$0x3f]
  %v45 = vlaneseq
  %v46 = vshrl.u32 %v45, 7
  %v47 = vsub.s32 0, %v46
  %v48 = vrot.slane %v43, %v47
  %v49 = vlaneseq
  %v50 = vshrl.u32 %v49, 7
  %v51 = vsub.s32 1, %v50
  %v52 = vrot.slane %v43, %v51
  %v53 = vlaneseq
  %v54 = vshrl.u32 %v53, 7
  %v55 = vsub.s32 2, %v54
  %v56 = vrot.slane %v43, %v55
  %v57 = vlaneseq
  %v58 = vshrl.u32 %v57, 7
  %v59 = vsub.s32 3, %v58
  %v60 = vrot.slane %v43, %v59
  %v61 = vlaneseq
  %v62 = vshrl.u32 %v61, 7
  %v63 = vsub.s32 4, %v62
  %v64 = vrot.slane %v43, %v63
  %v65 = vlaneseq
  %v66 = vshrl.u32 %v65, 7
  %v67 = vsub.s32 5, %v66
  %v68 = vrot.slane %v43, %v67
  %v78 = vcombine.high %v40, %v40
  %v79 = vcombine.high %v41, %v41
  %v80 = vcombine.high %v42, %v42
  %vm81 = vcmask 31744
  %v83 = vsel %vm81, %v32, 0
  %v86 = vsel %vm81, %v33, 0
  %v89 = vsel %vm81, %v34, 0
  %v92 = vsel %vm81, %v35, 0
  %v95 = vsel %vm81, %v36, 0
  %v98 = vsel %vm81, %v37, 0
  %v101 = vsel %vm81, %v38, 0
  %v104 = vsel %vm81, %v39, 0
  %vm106 = vcmask 1043456
  %v107 = vsel %vm106, %v40, 0
  %v109 = vsel %vm106, %v78, 0
  %v111 = vsel %vm106, %v41, 0
  %v113 = vsel %vm106, %v79, 0
  %v115 = vsel %vm106, %v42, 0
  %v117 = vsel %vm106, %v80, 0
  %119 = vmatprep.subr.mxu0 %v109
  %120 = vmatpush1.msra.mxu0 %v107
  %121 = vmatprep.subr.mxu0 0.0
  %122 = vmatpush1.msra.mxu0 0.0
  %123 = vmatprep.subr.mxu0 0.0
  %124 = vmatpush1.msra.mxu0 0.0
  %125 = vmatprep.subr.mxu0 0.0
  %126 = vmatpush1.msra.mxu0 0.0
  %127 = vmatprep.subr.mxu0 0.0
  %128 = vmatpush1.msra.mxu0 0.0
  %129 = vmatprep.subr.mxu0 0.0
  %130 = vmatpush1.msra.mxu0 0.0
  %131 = vmatprep.subr.mxu0 0.0
  %132 = vmatpush1.msra.mxu0 0.0
  %133 = vmatprep.subr.mxu0 0.0
  %134 = vmatpush1.msra.mxu0 0.0
  %135 = vmatprep.subr.mxu0 0.0
  %136 = vmatpush1.msra.mxu0 0.0
  %137 = vmatprep.subr.mxu0 0.0
  %138 = vmatpush1.msra.mxu0 0.0
  %139 = vmatprep.subr.mxu0 0.0
  %140 = vmatpush1.msra.mxu0 0.0
  %141 = vmatprep.subr.mxu0 0.0
  %142 = vmatpush1.msra.mxu0 0.0
  %143 = vmatprep.subr.mxu0 0.0
  %144 = vmatpush1.msra.mxu0 0.0
  %145 = vmatprep.subr.mxu0 0.0
  %146 = vmatpush1.msra.mxu0 0.0
  %147 = vmatprep.subr.mxu0 0.0
  %148 = vmatpush1.msra.mxu0 0.0
  %149 = vmatprep.subr.mxu0 0.0
  %150 = vmatpush1.msra.mxu0 0.0
  %151 = vmatprep.subr.mxu0 0.0
  %152 = vmatpush1.msra.mxu0 0.0
  %153 = vmatprep.subr.mxu0 0.0
  %154 = vmatpush1.msra.mxu0 0.0
  %155 = vmatprep.subr.mxu0 0.0
  %156 = vmatpush1.msra.mxu0 0.0
  %157 = vmatprep.subr.mxu0 0.0
  %158 = vmatpush1.msra.mxu0 0.0
  %159 = vmatprep.subr.mxu0 0.0
  %160 = vmatpush1.msra.mxu0 0.0
  %161 = vmatprep.subr.mxu0 0.0
  %162 = vmatpush1.msra.mxu0 0.0
  %163 = vmatprep.subr.mxu0 0.0
  %164 = vmatpush1.msra.mxu0 0.0
  %165 = vmatprep.subr.mxu0 0.0
  %166 = vmatpush1.msra.mxu0 0.0
  %167 = vmatprep.subr.mxu0 0.0
  %168 = vmatpush1.msra.mxu0 0.0
  %169 = vmatprep.subr.mxu0 0.0
  %170 = vmatpush1.msra.mxu0 0.0
  %171 = vmatprep.subr.mxu0 0.0
  %172 = vmatpush1.msra.mxu0 0.0
  %173 = vmatprep.subr.mxu0 0.0
  %174 = vmatpush1.msra.mxu0 0.0
  %175 = vmatprep.subr.mxu0 0.0
  %176 = vmatpush1.msra.mxu0 0.0
  %177 = vmatprep.subr.mxu0 0.0
  %178 = vmatpush1.msra.mxu0 0.0
  %179 = vmatprep.subr.mxu0 0.0
  %180 = vmatpush1.msra.mxu0 0.0
  %181 = vmatprep.subr.mxu0 0.0
  %182 = vmatpush1.msra.mxu0 0.0
  %183 = vmatprep.mubr.f32.mxu0 0.0
  %184 = vmatmul.mubr.f32.gmra.mrb[0].mxu0 %v83
  %v185 = vpop.f32.mrb[0].mxu0
  %v186 = vadd.f32 %v48, %v185
  %v187 = vpop.f32.mrb[0].mxu0
  %v188 = vadd.f32 %v52, %v187
  %189 = vmatprep.mubr.f32.mxu0 0.0
  %190 = vmatmul.mubr.f32.gmra.mrb[0].mxu0 %v86
  %v191 = vpop.f32.mrb[0].mxu0
  %v192 = vadd.f32 %v48, %v191
  %v193 = vpop.f32.mrb[0].mxu0
  %v194 = vadd.f32 %v52, %v193
  %195 = vmatprep.mubr.f32.mxu0 0.0
  %196 = vmatmul.mubr.f32.gmra.mrb[0].mxu0 %v89
  %v197 = vpop.f32.mrb[0].mxu0
  %v198 = vadd.f32 %v48, %v197
  %v199 = vpop.f32.mrb[0].mxu0
  %v200 = vadd.f32 %v52, %v199
  %201 = vmatprep.mubr.f32.mxu0 0.0
  %202 = vmatmul.mubr.f32.gmra.mrb[0].mxu0 %v92
  %v203 = vpop.f32.mrb[0].mxu0
  %v204 = vadd.f32 %v48, %v203
  %v205 = vpop.f32.mrb[0].mxu0
  %v206 = vadd.f32 %v52, %v205
  %207 = vmatprep.mubr.f32.mxu0 0.0
  %208 = vmatmul.mubr.f32.gmra.mrb[0].mxu0 %v95
  %v209 = vpop.f32.mrb[0].mxu0
  %v210 = vadd.f32 %v48, %v209
  %v211 = vpop.f32.mrb[0].mxu0
  %v212 = vadd.f32 %v52, %v211
  %213 = vmatprep.mubr.f32.mxu0 0.0
  %214 = vmatmul.mubr.f32.gmra.mrb[0].mxu0 %v98
  %v215 = vpop.f32.mrb[0].mxu0
  %v216 = vadd.f32 %v48, %v215
  %v217 = vpop.f32.mrb[0].mxu0
  %v218 = vadd.f32 %v52, %v217
  %219 = vmatprep.mubr.f32.mxu0 0.0
  %220 = vmatmul.mubr.f32.gmra.mrb[0].mxu0 %v101
  %v221 = vpop.f32.mrb[0].mxu0
  %v222 = vadd.f32 %v48, %v221
  %v223 = vpop.f32.mrb[0].mxu0
  %v224 = vadd.f32 %v52, %v223
  %225 = vmatprep.mubr.f32.mxu0 0.0
  %226 = vmatmul.mubr.f32.gmra.mrb[0].mxu0 %v104
  %v227 = vpop.f32.mrb[0].mxu0
  %v228 = vadd.f32 %v48, %v227
  %v229 = vpop.f32.mrb[0].mxu0
  %v230 = vadd.f32 %v52, %v229
  %231 = vdwg.mxu0
  %232 = vmatprep.subr.mxu0 %v113
  %233 = vmatpush1.msra.mxu0 %v111
  %234 = vmatprep.subr.mxu0 0.0
  %235 = vmatpush1.msra.mxu0 0.0
  %236 = vmatprep.subr.mxu0 0.0
  %237 = vmatpush1.msra.mxu0 0.0
  %238 = vmatprep.subr.mxu0 0.0
  %239 = vmatpush1.msra.mxu0 0.0
  %240 = vmatprep.subr.mxu0 0.0
  %241 = vmatpush1.msra.mxu0 0.0
  %242 = vmatprep.subr.mxu0 0.0
  %243 = vmatpush1.msra.mxu0 0.0
  %244 = vmatprep.subr.mxu0 0.0
  %245 = vmatpush1.msra.mxu0 0.0
  %246 = vmatprep.subr.mxu0 0.0
  %247 = vmatpush1.msra.mxu0 0.0
  %248 = vmatprep.subr.mxu0 0.0
  %249 = vmatpush1.msra.mxu0 0.0
  %250 = vmatprep.subr.mxu0 0.0
  %251 = vmatpush1.msra.mxu0 0.0
  %252 = vmatprep.subr.mxu0 0.0
  %253 = vmatpush1.msra.mxu0 0.0
  %254 = vmatprep.subr.mxu0 0.0
  %255 = vmatpush1.msra.mxu0 0.0
  %256 = vmatprep.subr.mxu0 0.0
  %257 = vmatpush1.msra.mxu0 0.0
  %258 = vmatprep.subr.mxu0 0.0
  %259 = vmatpush1.msra.mxu0 0.0
  %260 = vmatprep.subr.mxu0 0.0
  %261 = vmatpush1.msra.mxu0 0.0
  %262 = vmatprep.subr.mxu0 0.0
  %263 = vmatpush1.msra.mxu0 0.0
  %264 = vmatprep.subr.mxu0 0.0
  %265 = vmatpush1.msra.mxu0 0.0
  %266 = vmatprep.subr.mxu0 0.0
  %267 = vmatpush1.msra.mxu0 0.0
  %268 = vmatprep.subr.mxu0 0.0
  %269 = vmatpush1.msra.mxu0 0.0
  %270 = vmatprep.subr.mxu0 0.0
  %271 = vmatpush1.msra.mxu0 0.0
  %272 = vmatprep.subr.mxu0 0.0
  %273 = vmatpush1.msra.mxu0 0.0
  %274 = vmatprep.subr.mxu0 0.0
  %275 = vmatpush1.msra.mxu0 0.0
  %276 = vmatprep.subr.mxu0 0.0
  %277 = vmatpush1.msra.mxu0 0.0
  %278 = vmatprep.subr.mxu0 0.0
  %279 = vmatpush1.msra.mxu0 0.0
  %280 = vmatprep.subr.mxu0 0.0
  %281 = vmatpush1.msra.mxu0 0.0
  %282 = vmatprep.subr.mxu0 0.0
  %283 = vmatpush1.msra.mxu0 0.0
  %284 = vmatprep.subr.mxu0 0.0
  %285 = vmatpush1.msra.mxu0 0.0
  %286 = vmatprep.subr.mxu0 0.0
  %287 = vmatpush1.msra.mxu0 0.0
  %288 = vmatprep.subr.mxu0 0.0
  %289 = vmatpush1.msra.mxu0 0.0
  %290 = vmatprep.subr.mxu0 0.0
  %291 = vmatpush1.msra.mxu0 0.0
  %292 = vmatprep.subr.mxu0 0.0
  %293 = vmatpush1.msra.mxu0 0.0
  %294 = vmatprep.subr.mxu0 0.0
  %295 = vmatpush1.msra.mxu0 0.0
  %296 = vmatprep.mubr.f32.mxu0 0.0
  %297 = vmatmul.mubr.f32.gmra.mrb[0].mxu0 %v83
  %v298 = vpop.f32.mrb[0].mxu0
  %v299 = vadd.f32 %v56, %v298
  %v300 = vpop.f32.mrb[0].mxu0
  %301 = vmatprep.mubr.f32.mxu0 0.0
  %302 = vmatmul.mubr.f32.gmra.mrb[0].mxu0 %v86
  %v303 = vpop.f32.mrb[0].mxu0
  %v304 = vadd.f32 %v56, %v303
  %v305 = vpop.f32.mrb[0].mxu0
  %306 = vmatprep.mubr.f32.mxu0 0.0
  %307 = vmatmul.mubr.f32.gmra.mrb[0].mxu0 %v89
  %v308 = vpop.f32.mrb[0].mxu0
  %v309 = vadd.f32 %v56, %v308
  %v310 = vpop.f32.mrb[0].mxu0
  %311 = vmatprep.mubr.f32.mxu0 0.0
  %312 = vmatmul.mubr.f32.gmra.mrb[0].mxu0 %v92
  %v313 = vpop.f32.mrb[0].mxu0
  %v314 = vadd.f32 %v56, %v313
  %v315 = vpop.f32.mrb[0].mxu0
  %316 = vmatprep.mubr.f32.mxu0 0.0
  %317 = vmatmul.mubr.f32.gmra.mrb[0].mxu0 %v95
  %v318 = vpop.f32.mrb[0].mxu0
  %v319 = vadd.f32 %v56, %v318
  %v320 = vpop.f32.mrb[0].mxu0
  %321 = vmatprep.mubr.f32.mxu0 0.0
  %322 = vmatmul.mubr.f32.gmra.mrb[0].mxu0 %v98
  %v323 = vpop.f32.mrb[0].mxu0
  %v324 = vadd.f32 %v56, %v323
  %v325 = vpop.f32.mrb[0].mxu0
  %326 = vmatprep.mubr.f32.mxu0 0.0
  %327 = vmatmul.mubr.f32.gmra.mrb[0].mxu0 %v101
  %v328 = vpop.f32.mrb[0].mxu0
  %v329 = vadd.f32 %v56, %v328
  %v330 = vpop.f32.mrb[0].mxu0
  %331 = vmatprep.mubr.f32.mxu0 0.0
  %332 = vmatmul.mubr.f32.gmra.mrb[0].mxu0 %v104
  %v333 = vpop.f32.mrb[0].mxu0
  %v334 = vadd.f32 %v56, %v333
  %v335 = vpop.f32.mrb[0].mxu0
  %v336 = vadd.f32 %v60, %v335
  %337 = vdwg.mxu0
  %338 = vmatprep.subr.mxu0 %v117
  %339 = vmatpush1.msra.mxu0 %v115
  %340 = vmatprep.subr.mxu0 0.0
  %341 = vmatpush1.msra.mxu0 0.0
  %342 = vmatprep.subr.mxu0 0.0
  %343 = vmatpush1.msra.mxu0 0.0
  %344 = vmatprep.subr.mxu0 0.0
  %345 = vmatpush1.msra.mxu0 0.0
  %346 = vmatprep.subr.mxu0 0.0
  %347 = vmatpush1.msra.mxu0 0.0
  %348 = vmatprep.subr.mxu0 0.0
  %349 = vmatpush1.msra.mxu0 0.0
  %350 = vmatprep.subr.mxu0 0.0
  %351 = vmatpush1.msra.mxu0 0.0
  %352 = vmatprep.subr.mxu0 0.0
  %353 = vmatpush1.msra.mxu0 0.0
  %354 = vmatprep.subr.mxu0 0.0
  %355 = vmatpush1.msra.mxu0 0.0
  %356 = vmatprep.subr.mxu0 0.0
  %357 = vmatpush1.msra.mxu0 0.0
  %358 = vmatprep.subr.mxu0 0.0
  %359 = vmatpush1.msra.mxu0 0.0
  %360 = vmatprep.subr.mxu0 0.0
  %361 = vmatpush1.msra.mxu0 0.0
  %362 = vmatprep.subr.mxu0 0.0
  %363 = vmatpush1.msra.mxu0 0.0
  %364 = vmatprep.subr.mxu0 0.0
  %365 = vmatpush1.msra.mxu0 0.0
  %366 = vmatprep.subr.mxu0 0.0
  %367 = vmatpush1.msra.mxu0 0.0
  %368 = vmatprep.subr.mxu0 0.0
  %369 = vmatpush1.msra.mxu0 0.0
  %370 = vmatprep.subr.mxu0 0.0
  %371 = vmatpush1.msra.mxu0 0.0
  %372 = vmatprep.subr.mxu0 0.0
  %373 = vmatpush1.msra.mxu0 0.0
  %374 = vmatprep.subr.mxu0 0.0
  %375 = vmatpush1.msra.mxu0 0.0
  %376 = vmatprep.subr.mxu0 0.0
  %377 = vmatpush1.msra.mxu0 0.0
  %378 = vmatprep.subr.mxu0 0.0
  %379 = vmatpush1.msra.mxu0 0.0
  %380 = vmatprep.subr.mxu0 0.0
  %381 = vmatpush1.msra.mxu0 0.0
  %382 = vmatprep.subr.mxu0 0.0
  %383 = vmatpush1.msra.mxu0 0.0
  %384 = vmatprep.subr.mxu0 0.0
  %385 = vmatpush1.msra.mxu0 0.0
  %386 = vmatprep.subr.mxu0 0.0
  %387 = vmatpush1.msra.mxu0 0.0
  %388 = vmatprep.subr.mxu0 0.0
  %389 = vmatpush1.msra.mxu0 0.0
  %390 = vmatprep.subr.mxu0 0.0
  %391 = vmatpush1.msra.mxu0 0.0
  %392 = vmatprep.subr.mxu0 0.0
  %393 = vmatpush1.msra.mxu0 0.0
  %394 = vmatprep.subr.mxu0 0.0
  %395 = vmatpush1.msra.mxu0 0.0
  %396 = vmatprep.subr.mxu0 0.0
  %397 = vmatpush1.msra.mxu0 0.0
  %398 = vmatprep.subr.mxu0 0.0
  %399 = vmatpush1.msra.mxu0 0.0
  %400 = vmatprep.subr.mxu0 0.0
  %401 = vmatpush1.msra.mxu0 0.0
  %402 = vmatprep.mubr.f32.mxu0 0.0
  %403 = vmatmul.mubr.f32.gmra.mrb[0].mxu0 %v83
  %v404 = vpop.f32.mrb[0].mxu0
  %v405 = vpop.f32.mrb[0].mxu0
  %406 = vmatprep.mubr.f32.mxu0 0.0
  %407 = vmatmul.mubr.f32.gmra.mrb[0].mxu0 %v86
  %v408 = vpop.f32.mrb[0].mxu0
  %v409 = vpop.f32.mrb[0].mxu0
  %410 = vmatprep.mubr.f32.mxu0 0.0
  %411 = vmatmul.mubr.f32.gmra.mrb[0].mxu0 %v89
  %v412 = vpop.f32.mrb[0].mxu0
  %v413 = vpop.f32.mrb[0].mxu0
  %414 = vmatprep.mubr.f32.mxu0 0.0
  %415 = vmatmul.mubr.f32.gmra.mrb[0].mxu0 %v92
  %v416 = vpop.f32.mrb[0].mxu0
  %v417 = vpop.f32.mrb[0].mxu0
  %418 = vmatprep.mubr.f32.mxu0 0.0
  %419 = vmatmul.mubr.f32.gmra.mrb[0].mxu0 %v95
  %v420 = vpop.f32.mrb[0].mxu0
  %v421 = vpop.f32.mrb[0].mxu0
  %422 = vmatprep.mubr.f32.mxu0 0.0
  %423 = vmatmul.mubr.f32.gmra.mrb[0].mxu0 %v98
  %v424 = vpop.f32.mrb[0].mxu0
  %v425 = vpop.f32.mrb[0].mxu0
  %426 = vmatprep.mubr.f32.mxu0 0.0
  %427 = vmatmul.mubr.f32.gmra.mrb[0].mxu0 %v101
  %v428 = vpop.f32.mrb[0].mxu0
  %v429 = vpop.f32.mrb[0].mxu0
  %430 = vmatprep.mubr.f32.mxu0 0.0
  %431 = vmatmul.mubr.f32.gmra.mrb[0].mxu0 %v104
  %v432 = vpop.f32.mrb[0].mxu0
  %v433 = vadd.f32 %v64, %v432
  %v434 = vpop.f32.mrb[0].mxu0
  %v435 = vadd.f32 %v68, %v434
  %436 = vdwg.mxu0
  %v437 = vld [vmem:[%s3] sm:$0xff]
  %v438 = vld [vmem:[%s3 + $0x8] sm:$0xff]
  %v439 = vld [vmem:[%s3 + $0x10] sm:$0xff]
  %v440 = vld [vmem:[%s3 + $0x18] sm:$0xff]
  %v441 = vld [vmem:[%s3 + $0x20] sm:$0xff]
  %v442 = vld [vmem:[%s3 + $0x28] sm:$0xff]
  %v443 = vld [vmem:[%s3 + $0x30] sm:$0xff]
  %v444 = vld [vmem:[%s3 + $0x38] sm:$0xff]
  %v445 = vld [vmem:[%s3 + $0x40] sm:$0xff]
  %v446 = vld [vmem:[%s3 + $0x48] sm:$0xff]
  %v447 = vld [vmem:[%s3 + $0x50] sm:$0xff]
  %v448 = vld [vmem:[%s3 + $0x58] sm:$0xff]
  %v449 = vld [vmem:[%s3 + $0x60] sm:$0xff]
  %v450 = vld [vmem:[%s3 + $0x68] sm:$0xff]
  %v451 = vld [vmem:[%s3 + $0x70] sm:$0xff]
  %v452 = vld [vmem:[%s3 + $0x78] sm:$0xff]
  %v453 = vld [vmem:[%s3 + $0x80] sm:$0xff]
  %v454 = vld [vmem:[%s3 + $0x88] sm:$0xff]
  %v455 = vld [vmem:[%s3 + $0x90] sm:$0xff]
  %v456 = vld [vmem:[%s3 + $0x98] sm:$0xff]
  %v457 = vld [vmem:[%s3 + $0xa0] sm:$0xff]
  %v458 = vld [vmem:[%s3 + $0xa8] sm:$0xff]
  %v459 = vld [vmem:[%s3 + $0xb0] sm:$0xff]
  %v460 = vld [vmem:[%s3 + $0xb8] sm:$0xff]
  %v461 = vld [vmem:[%s3 + $0xc0] sm:$0xff]
  %v462 = vld [vmem:[%s3 + $0xc8] sm:$0xff]
  %v463 = vld [vmem:[%s3 + $0xd0] sm:$0xff]
  %v464 = vld [vmem:[%s3 + $0xd8] sm:$0xff]
  %v465 = vld [vmem:[%s3 + $0xe0] sm:$0xff]
  %v466 = vld [vmem:[%s3 + $0xe8] sm:$0xff]
  %v467 = vld [vmem:[%s3 + $0xf0] sm:$0xff]
  %v468 = vld [vmem:[%s3 + $0xf8] sm:$0xff]
  %v469 = vld [vmem:[%s3 + $0x100] sm:$0xff]
  %v470 = vld [vmem:[%s3 + $0x108] sm:$0xff]
  %v471 = vld [vmem:[%s3 + $0x110] sm:$0xff]
  %v472 = vld [vmem:[%s3 + $0x118] sm:$0xff]
  %v473 = vld [vmem:[%s3 + $0x120] sm:$0xff]
  %v474 = vld [vmem:[%s3 + $0x128] sm:$0xff]
  %v475 = vld [vmem:[%s3 + $0x130] sm:$0xff]
  %v476 = vld [vmem:[%s3 + $0x138] sm:$0xff]
  %v477 = vld [vmem:[%s3 + $0x140] sm:$0xff]
  %v478 = vld [vmem:[%s3 + $0x148] sm:$0xff]
  %v479 = vld [vmem:[%s3 + $0x150] sm:$0xff]
  %v480 = vld [vmem:[%s3 + $0x158] sm:$0xff]
  %v481 = vld [vmem:[%s3 + $0x160] sm:$0xff]
  %v482 = vld [vmem:[%s3 + $0x168] sm:$0xff]
  %v483 = vld [vmem:[%s3 + $0x170] sm:$0xff]
  %v484 = vld [vmem:[%s3 + $0x178] sm:$0xff]
  %v485 = vld [vmem:[%s4] sm:$0x1]
  %v487 = vlaneseq
  %v488 = vshrl.u32 %v487, 7
  %v489 = vsub.s32 0, %v488
  %v490 = vrot.slane %v485, %v489
  %v492 = vld [vmem:[%s5] sm:$0x1]
  %v494 = vlaneseq
  %v495 = vshrl.u32 %v494, 7
  %v496 = vsub.s32 0, %v495
  %v497 = vrot.slane %v492, %v496
  %499 = vmatprep.subr.mxu0 %v438
  %500 = vmatpush1.msra.mxu0 %v437
  %501 = vmatprep.subr.mxu0 %v441
  %502 = vmatpush1.msra.mxu0 %v440
  %503 = vmatprep.subr.mxu0 %v444
  %504 = vmatpush1.msra.mxu0 %v443
  %505 = vmatprep.subr.mxu0 %v447
  %506 = vmatpush1.msra.mxu0 %v446
  %507 = vmatprep.subr.mxu0 %v450
  %508 = vmatpush1.msra.mxu0 %v449
  %509 = vmatprep.subr.mxu0 %v453
  %510 = vmatpush1.msra.mxu0 %v452
  %511 = vmatprep.subr.mxu0 %v456
  %512 = vmatpush1.msra.mxu0 %v455
  %513 = vmatprep.subr.mxu0 %v459
  %514 = vmatpush1.msra.mxu0 %v458
  %515 = vmatprep.subr.mxu0 %v462
  %516 = vmatpush1.msra.mxu0 %v461
  %517 = vmatprep.subr.mxu0 %v465
  %518 = vmatpush1.msra.mxu0 %v464
  %519 = vmatprep.subr.mxu0 %v468
  %520 = vmatpush1.msra.mxu0 %v467
  %521 = vmatprep.subr.mxu0 %v471
  %522 = vmatpush1.msra.mxu0 %v470
  %523 = vmatprep.subr.mxu0 %v474
  %524 = vmatpush1.msra.mxu0 %v473
  %525 = vmatprep.subr.mxu0 %v477
  %526 = vmatpush1.msra.mxu0 %v476
  %527 = vmatprep.subr.mxu0 %v480
  %528 = vmatpush1.msra.mxu0 %v479
  %529 = vmatprep.subr.mxu0 %v483
  %530 = vmatpush1.msra.mxu0 %v482
  %531 = vmatprep.subr.mxu0 0.0
  %532 = vmatpush1.msra.mxu0 0.0
  %533 = vmatprep.subr.mxu0 0.0
  %534 = vmatpush1.msra.mxu0 0.0
  %535 = vmatprep.subr.mxu0 0.0
  %536 = vmatpush1.msra.mxu0 0.0
  %537 = vmatprep.subr.mxu0 0.0
  %538 = vmatpush1.msra.mxu0 0.0
  %539 = vmatprep.subr.mxu0 0.0
  %540 = vmatpush1.msra.mxu0 0.0
  %541 = vmatprep.subr.mxu0 0.0
  %542 = vmatpush1.msra.mxu0 0.0
  %543 = vmatprep.subr.mxu0 0.0
  %544 = vmatpush1.msra.mxu0 0.0
  %545 = vmatprep.subr.mxu0 0.0
  %546 = vmatpush1.msra.mxu0 0.0
  %547 = vmatprep.subr.mxu0 0.0
  %548 = vmatpush1.msra.mxu0 0.0
  %549 = vmatprep.subr.mxu0 0.0
  %550 = vmatpush1.msra.mxu0 0.0
  %551 = vmatprep.subr.mxu0 0.0
  %552 = vmatpush1.msra.mxu0 0.0
  %553 = vmatprep.subr.mxu0 0.0
  %554 = vmatpush1.msra.mxu0 0.0
  %555 = vmatprep.subr.mxu0 0.0
  %556 = vmatpush1.msra.mxu0 0.0
  %557 = vmatprep.subr.mxu0 0.0
  %558 = vmatpush1.msra.mxu0 0.0
  %559 = vmatprep.subr.mxu0 0.0
  %560 = vmatpush1.msra.mxu0 0.0
  %561 = vmatprep.subr.mxu0 0.0
  %562 = vmatpush1.msra.mxu0 0.0
  %563 = vmatprep.mubr.f32.mxu0 0.0
  %564 = vmatmul.mubr.f32.gmra.mrb[0].mxu0 0.0
  %v565 = vpop.f32.mrb[0].mxu0
  %v566 = vadd.f32 0.0, %v565
  %v567 = vpop.f32.mrb[0].mxu0
  %v568 = vadd.f32 0.0, %v567
  %569 = vdwg.mxu0
  %570 = vmatprep.subr.mxu0 0.0
  %571 = vmatpush1.msra.mxu0 %v439
  %572 = vmatprep.subr.mxu0 0.0
  %573 = vmatpush1.msra.mxu0 %v442
  %574 = vmatprep.subr.mxu0 0.0
  %575 = vmatpush1.msra.mxu0 %v445
  %576 = vmatprep.subr.mxu0 0.0
  %577 = vmatpush1.msra.mxu0 %v448
  %578 = vmatprep.subr.mxu0 0.0
  %579 = vmatpush1.msra.mxu0 %v451
  %580 = vmatprep.subr.mxu0 0.0
  %581 = vmatpush1.msra.mxu0 %v454
  %582 = vmatprep.subr.mxu0 0.0
  %583 = vmatpush1.msra.mxu0 %v457
  %584 = vmatprep.subr.mxu0 0.0
  %585 = vmatpush1.msra.mxu0 %v460
  %586 = vmatprep.subr.mxu0 0.0
  %587 = vmatpush1.msra.mxu0 %v463
  %588 = vmatprep.subr.mxu0 0.0
  %589 = vmatpush1.msra.mxu0 %v466
  %590 = vmatprep.subr.mxu0 0.0
  %591 = vmatpush1.msra.mxu0 %v469
  %592 = vmatprep.subr.mxu0 0.0
  %593 = vmatpush1.msra.mxu0 %v472
  %594 = vmatprep.subr.mxu0 0.0
  %595 = vmatpush1.msra.mxu0 %v475
  %596 = vmatprep.subr.mxu0 0.0
  %597 = vmatpush1.msra.mxu0 %v478
  %598 = vmatprep.subr.mxu0 0.0
  %599 = vmatpush1.msra.mxu0 %v481
  %600 = vmatprep.subr.mxu0 0.0
  %601 = vmatpush1.msra.mxu0 %v484
  %602 = vmatprep.subr.mxu0 0.0
  %603 = vmatpush1.msra.mxu0 0.0
  %604 = vmatprep.subr.mxu0 0.0
  %605 = vmatpush1.msra.mxu0 0.0
  %606 = vmatprep.subr.mxu0 0.0
  %607 = vmatpush1.msra.mxu0 0.0
  %608 = vmatprep.subr.mxu0 0.0
  %609 = vmatpush1.msra.mxu0 0.0
  %610 = vmatprep.subr.mxu0 0.0
  %611 = vmatpush1.msra.mxu0 0.0
  %612 = vmatprep.subr.mxu0 0.0
  %613 = vmatpush1.msra.mxu0 0.0
  %614 = vmatprep.subr.mxu0 0.0
  %615 = vmatpush1.msra.mxu0 0.0
  %616 = vmatprep.subr.mxu0 0.0
  %617 = vmatpush1.msra.mxu0 0.0
  %618 = vmatprep.subr.mxu0 0.0
  %619 = vmatpush1.msra.mxu0 0.0
  %620 = vmatprep.subr.mxu0 0.0
  %621 = vmatpush1.msra.mxu0 0.0
  %622 = vmatprep.subr.mxu0 0.0
  %623 = vmatpush1.msra.mxu0 0.0
  %624 = vmatprep.subr.mxu0 0.0
  %625 = vmatpush1.msra.mxu0 0.0
  %626 = vmatprep.subr.mxu0 0.0
  %627 = vmatpush1.msra.mxu0 0.0
  %628 = vmatprep.subr.mxu0 0.0
  %629 = vmatpush1.msra.mxu0 0.0
  %630 = vmatprep.subr.mxu0 0.0
  %631 = vmatpush1.msra.mxu0 0.0
  %632 = vmatprep.subr.mxu0 0.0
  %633 = vmatpush1.msra.mxu0 0.0
  %634 = vmatprep.mubr.f32.mxu0 0.0
  %635 = vmatmul.mubr.f32.gmra.mrb[0].mxu0 0.0
  %v636 = vpop.f32.mrb[0].mxu0
  %v637 = vadd.f32 0.0, %v636
  %v638 = vpop.f32.mrb[0].mxu0
  %639 = vdwg.mxu0
  %v640 = vadd.f32 %v186, %v566
  %v641 = vxor.u32 %v640, 2147483648
  %v642 = vmul.f32 %v641, 1.442695
  %v643 = vpow.pop %v642
  %v644 = vadd.f32 %v643, 1.0
  %v645 = vrcp.pop %v644
  %v646 = vmul.f32 1.0, %v645
  %v647 = vadd.f32 %v188, %v568
  %v648 = vxor.u32 %v647, 2147483648
  %v649 = vmul.f32 %v648, 1.442695
  %v650 = vpow.pop %v649
  %v651 = vadd.f32 %v650, 1.0
  %v652 = vrcp.pop %v651
  %v653 = vmul.f32 1.0, %v652
  %v654 = vadd.f32 %v637, %v490
  %v655 = vmul.f32 %v646, %v654
  %v656 = vadd.f32 %v299, %v655
  %v657 = vtanh.pop %v656
  %v658 = vsub.f32 1.0, %v653
  %v659 = vmul.f32 %v658, %v657
  %v660 = vmul.f32 %v653, 0.0
  %v661 = vadd.f32 %v659, %v660
  %662 = vmatprep.subr.mxu0 %v438
  %663 = vmatpush1.msra.mxu0 %v437
  %664 = vmatprep.subr.mxu0 %v441
  %665 = vmatpush1.msra.mxu0 %v440
  %666 = vmatprep.subr.mxu0 %v444
  %667 = vmatpush1.msra.mxu0 %v443
  %668 = vmatprep.subr.mxu0 %v447
  %669 = vmatpush1.msra.mxu0 %v446
  %670 = vmatprep.subr.mxu0 %v450
  %671 = vmatpush1.msra.mxu0 %v449
  %672 = vmatprep.subr.mxu0 %v453
  %673 = vmatpush1.msra.mxu0 %v452
  %674 = vmatprep.subr.mxu0 %v456
  %675 = vmatpush1.msra.mxu0 %v455
  %676 = vmatprep.subr.mxu0 %v459
  %677 = vmatpush1.msra.mxu0 %v458
  %678 = vmatprep.subr.mxu0 %v462
  %679 = vmatpush1.msra.mxu0 %v461
  %680 = vmatprep.subr.mxu0 %v465
  %681 = vmatpush1.msra.mxu0 %v464
  %682 = vmatprep.subr.mxu0 %v468
  %683 = vmatpush1.msra.mxu0 %v467
  %684 = vmatprep.subr.mxu0 %v471
  %685 = vmatpush1.msra.mxu0 %v470
  %686 = vmatprep.subr.mxu0 %v474
  %687 = vmatpush1.msra.mxu0 %v473
  %688 = vmatprep.subr.mxu0 %v477
  %689 = vmatpush1.msra.mxu0 %v476
  %690 = vmatprep.subr.mxu0 %v480
  %691 = vmatpush1.msra.mxu0 %v479
  %692 = vmatprep.subr.mxu0 %v483
  %693 = vmatpush1.msra.mxu0 %v482
  %694 = vmatprep.subr.mxu0 0.0
  %695 = vmatpush1.msra.mxu0 0.0
  %696 = vmatprep.subr.mxu0 0.0
  %697 = vmatpush1.msra.mxu0 0.0
  %698 = vmatprep.subr.mxu0 0.0
  %699 = vmatpush1.msra.mxu0 0.0
  %700 = vmatprep.subr.mxu0 0.0
  %701 = vmatpush1.msra.mxu0 0.0
  %702 = vmatprep.subr.mxu0 0.0
  %703 = vmatpush1.msra.mxu0 0.0
  %704 = vmatprep.subr.mxu0 0.0
  %705 = vmatpush1.msra.mxu0 0.0
  %706 = vmatprep.subr.mxu0 0.0
  %707 = vmatpush1.msra.mxu0 0.0
  %708 = vmatprep.subr.mxu0 0.0
  %709 = vmatpush1.msra.mxu0 0.0
  %710 = vmatprep.subr.mxu0 0.0
  %711 = vmatpush1.msra.mxu0 0.0
  %712 = vmatprep.subr.mxu0 0.0
  %713 = vmatpush1.msra.mxu0 0.0
  %714 = vmatprep.subr.mxu0 0.0
  %715 = vmatpush1.msra.mxu0 0.0
  %716 = vmatprep.subr.mxu0 0.0
  %717 = vmatpush1.msra.mxu0 0.0
  %718 = vmatprep.subr.mxu0 0.0
  %719 = vmatpush1.msra.mxu0 0.0
  %720 = vmatprep.subr.mxu0 0.0
  %721 = vmatpush1.msra.mxu0 0.0
  %722 = vmatprep.subr.mxu0 0.0
  %723 = vmatpush1.msra.mxu0 0.0
  %724 = vmatprep.subr.mxu0 0.0
  %725 = vmatpush1.msra.mxu0 0.0
  %726 = vmatprep.mubr.f32.mxu0 0.0
  %727 = vmatmul.mubr.f32.gmra.mrb[0].mxu0 %v661
  %v728 = vpop.f32.mrb[0].mxu0
  %v729 = vadd.f32 0.0, %v728
  %v730 = vpop.f32.mrb[0].mxu0
  %v731 = vadd.f32 0.0, %v730
  %732 = vdwg.mxu0
  %733 = vmatprep.subr.mxu0 0.0
  %734 = vmatpush1.msra.mxu0 %v439
  %735 = vmatprep.subr.mxu0 0.0
  %736 = vmatpush1.msra.mxu0 %v442
  %737 = vmatprep.subr.mxu0 0.0
  %738 = vmatpush1.msra.mxu0 %v445
  %739 = vmatprep.subr.mxu0 0.0
  %740 = vmatpush1.msra.mxu0 %v448
  %741 = vmatprep.subr.mxu0 0.0
  %742 = vmatpush1.msra.mxu0 %v451
  %743 = vmatprep.subr.mxu0 0.0
  %744 = vmatpush1.msra.mxu0 %v454
  %745 = vmatprep.subr.mxu0 0.0
  %746 = vmatpush1.msra.mxu0 %v457
  %747 = vmatprep.subr.mxu0 0.0
  %748 = vmatpush1.msra.mxu0 %v460
  %749 = vmatprep.subr.mxu0 0.0
  %750 = vmatpush1.msra.mxu0 %v463
  %751 = vmatprep.subr.mxu0 0.0
  %752 = vmatpush1.msra.mxu0 %v466
  %753 = vmatprep.subr.mxu0 0.0
  %754 = vmatpush1.msra.mxu0 %v469
  %755 = vmatprep.subr.mxu0 0.0
  %756 = vmatpush1.msra.mxu0 %v472
  %757 = vmatprep.subr.mxu0 0.0
  %758 = vmatpush1.msra.mxu0 %v475
  %759 = vmatprep.subr.mxu0 0.0
  %760 = vmatpush1.msra.mxu0 %v478
  %761 = vmatprep.subr.mxu0 0.0
  %762 = vmatpush1.msra.mxu0 %v481
  %763 = vmatprep.subr.mxu0 0.0
  %764 = vmatpush1.msra.mxu0 %v484
  %765 = vmatprep.subr.mxu0 0.0
  %766 = vmatpush1.msra.mxu0 0.0
  %767 = vmatprep.subr.mxu0 0.0
  %768 = vmatpush1.msra.mxu0 0.0
  %769 = vmatprep.subr.mxu0 0.0
  %770 = vmatpush1.msra.mxu0 0.0
  %771 = vmatprep.subr.mxu0 0.0
  %772 = vmatpush1.msra.mxu0 0.0
  %773 = vmatprep.subr.mxu0 0.0
  %774 = vmatpush1.msra.mxu0 0.0
  %775 = vmatprep.subr.mxu0 0.0
  %776 = vmatpush1.msra.mxu0 0.0
  %777 = vmatprep.subr.mxu0 0.0
  %778 = vmatpush1.msra.mxu0 0.0
  %779 = vmatprep.subr.mxu0 0.0
  %780 = vmatpush1.msra.mxu0 0.0
  %781 = vmatprep.subr.mxu0 0.0
  %782 = vmatpush1.msra.mxu0 0.0
  %783 = vmatprep.subr.mxu0 0.0
  %784 = vmatpush1.msra.mxu0 0.0
  %785 = vmatprep.subr.mxu0 0.0
  %786 = vmatpush1.msra.mxu0 0.0
  %787 = vmatprep.subr.mxu0 0.0
  %788 = vmatpush1.msra.mxu0 0.0
  %789 = vmatprep.subr.mxu0 0.0
  %790 = vmatpush1.msra.mxu0 0.0
  %791 = vmatprep.subr.mxu0 0.0
  %792 = vmatpush1.msra.mxu0 0.0
  %793 = vmatprep.subr.mxu0 0.0
  %794 = vmatpush1.msra.mxu0 0.0
  %795 = vmatprep.subr.mxu0 0.0
  %796 = vmatpush1.msra.mxu0 0.0
  %797 = vmatprep.mubr.f32.mxu0 0.0
  %798 = vmatmul.mubr.f32.gmra.mrb[0].mxu0 %v661
  %v799 = vpop.f32.mrb[0].mxu0
  %v800 = vadd.f32 0.0, %v799
  %v801 = vpop.f32.mrb[0].mxu0
  %802 = vdwg.mxu0
  %v803 = vadd.f32 %v192, %v729
  %v804 = vxor.u32 %v803, 2147483648
  %v805 = vmul.f32 %v804, 1.442695
  %v806 = vpow.pop %v805
  %v807 = vadd.f32 %v806, 1.0
  %v808 = vrcp.pop %v807
  %v809 = vmul.f32 1.0, %v808
  %v810 = vadd.f32 %v194, %v731
  %v811 = vxor.u32 %v810, 2147483648
  %v812 = vmul.f32 %v811, 1.442695
  %v813 = vpow.pop %v812
  %v814 = vadd.f32 %v813, 1.0
  %v815 = vrcp.pop %v814
  %v816 = vmul.f32 1.0, %v815
  %v817 = vadd.f32 %v800, %v490
  %v818 = vmul.f32 %v809, %v817
  %v819 = vadd.f32 %v304, %v818
  %v820 = vtanh.pop %v819
  %v821 = vsub.f32 1.0, %v816
  %v822 = vmul.f32 %v821, %v820
  %v823 = vmul.f32 %v816, %v661
  %v824 = vadd.f32 %v822, %v823
  %825 = vmatprep.subr.mxu0 %v438
  %826 = vmatpush1.msra.mxu0 %v437
  %827 = vmatprep.subr.mxu0 %v441
  %828 = vmatpush1.msra.mxu0 %v440
  %829 = vmatprep.subr.mxu0 %v444
  %830 = vmatpush1.msra.mxu0 %v443
  %831 = vmatprep.subr.mxu0 %v447
  %832 = vmatpush1.msra.mxu0 %v446
  %833 = vmatprep.subr.mxu0 %v450
  %834 = vmatpush1.msra.mxu0 %v449
  %835 = vmatprep.subr.mxu0 %v453
  %836 = vmatpush1.msra.mxu0 %v452
  %837 = vmatprep.subr.mxu0 %v456
  %838 = vmatpush1.msra.mxu0 %v455
  %839 = vmatprep.subr.mxu0 %v459
  %840 = vmatpush1.msra.mxu0 %v458
  %841 = vmatprep.subr.mxu0 %v462
  %842 = vmatpush1.msra.mxu0 %v461
  %843 = vmatprep.subr.mxu0 %v465
  %844 = vmatpush1.msra.mxu0 %v464
  %845 = vmatprep.subr.mxu0 %v468
  %846 = vmatpush1.msra.mxu0 %v467
  %847 = vmatprep.subr.mxu0 %v471
  %848 = vmatpush1.msra.mxu0 %v470
  %849 = vmatprep.subr.mxu0 %v474
  %850 = vmatpush1.msra.mxu0 %v473
  %851 = vmatprep.subr.mxu0 %v477
  %852 = vmatpush1.msra.mxu0 %v476
  %853 = vmatprep.subr.mxu0 %v480
  %854 = vmatpush1.msra.mxu0 %v479
  %855 = vmatprep.subr.mxu0 %v483
  %856 = vmatpush1.msra.mxu0 %v482
  %857 = vmatprep.subr.mxu0 0.0
  %858 = vmatpush1.msra.mxu0 0.0
  %859 = vmatprep.subr.mxu0 0.0
  %860 = vmatpush1.msra.mxu0 0.0
  %861 = vmatprep.subr.mxu0 0.0
  %862 = vmatpush1.msra.mxu0 0.0
  %863 = vmatprep.subr.mxu0 0.0
  %864 = vmatpush1.msra.mxu0 0.0
  %865 = vmatprep.subr.mxu0 0.0
  %866 = vmatpush1.msra.mxu0 0.0
  %867 = vmatprep.subr.mxu0 0.0
  %868 = vmatpush1.msra.mxu0 0.0
  %869 = vmatprep.subr.mxu0 0.0
  %870 = vmatpush1.msra.mxu0 0.0
  %871 = vmatprep.subr.mxu0 0.0
  %872 = vmatpush1.msra.mxu0 0.0
  %873 = vmatprep.subr.mxu0 0.0
  %874 = vmatpush1.msra.mxu0 0.0
  %875 = vmatprep.subr.mxu0 0.0
  %876 = vmatpush1.msra.mxu0 0.0
  %877 = vmatprep.subr.mxu0 0.0
  %878 = vmatpush1.msra.mxu0 0.0
  %879 = vmatprep.subr.mxu0 0.0
  %880 = vmatpush1.msra.mxu0 0.0
  %881 = vmatprep.subr.mxu0 0.0
  %882 = vmatpush1.msra.mxu0 0.0
  %883 = vmatprep.subr.mxu0 0.0
  %884 = vmatpush1.msra.mxu0 0.0
  %885 = vmatprep.subr.mxu0 0.0
  %886 = vmatpush1.msra.mxu0 0.0
  %887 = vmatprep.subr.mxu0 0.0
  %888 = vmatpush1.msra.mxu0 0.0
  %889 = vmatprep.mubr.f32.mxu0 0.0
  %890 = vmatmul.mubr.f32.gmra.mrb[0].mxu0 %v824
  %v891 = vpop.f32.mrb[0].mxu0
  %v892 = vadd.f32 0.0, %v891
  %v893 = vpop.f32.mrb[0].mxu0
  %v894 = vadd.f32 0.0, %v893
  %895 = vdwg.mxu0
  %896 = vmatprep.subr.mxu0 0.0
  %897 = vmatpush1.msra.mxu0 %v439
  %898 = vmatprep.subr.mxu0 0.0
  %899 = vmatpush1.msra.mxu0 %v442
  %900 = vmatprep.subr.mxu0 0.0
  %901 = vmatpush1.msra.mxu0 %v445
  %902 = vmatprep.subr.mxu0 0.0
  %903 = vmatpush1.msra.mxu0 %v448
  %904 = vmatprep.subr.mxu0 0.0
  %905 = vmatpush1.msra.mxu0 %v451
  %906 = vmatprep.subr.mxu0 0.0
  %907 = vmatpush1.msra.mxu0 %v454
  %908 = vmatprep.subr.mxu0 0.0
  %909 = vmatpush1.msra.mxu0 %v457
  %910 = vmatprep.subr.mxu0 0.0
  %911 = vmatpush1.msra.mxu0 %v460
  %912 = vmatprep.subr.mxu0 0.0
  %913 = vmatpush1.msra.mxu0 %v463
  %914 = vmatprep.subr.mxu0 0.0
  %915 = vmatpush1.msra.mxu0 %v466
  %916 = vmatprep.subr.mxu0 0.0
  %917 = vmatpush1.msra.mxu0 %v469
  %918 = vmatprep.subr.mxu0 0.0
  %919 = vmatpush1.msra.mxu0 %v472
  %920 = vmatprep.subr.mxu0 0.0
  %921 = vmatpush1.msra.mxu0 %v475
  %922 = vmatprep.subr.mxu0 0.0
  %923 = vmatpush1.msra.mxu0 %v478
  %924 = vmatprep.subr.mxu0 0.0
  %925 = vmatpush1.msra.mxu0 %v481
  %926 = vmatprep.subr.mxu0 0.0
  %927 = vmatpush1.msra.mxu0 %v484
  %928 = vmatprep.subr.mxu0 0.0
  %929 = vmatpush1.msra.mxu0 0.0
  %930 = vmatprep.subr.mxu0 0.0
  %931 = vmatpush1.msra.mxu0 0.0
  %932 = vmatprep.subr.mxu0 0.0
  %933 = vmatpush1.msra.mxu0 0.0
  %934 = vmatprep.subr.mxu0 0.0
  %935 = vmatpush1.msra.mxu0 0.0
  %936 = vmatprep.subr.mxu0 0.0
  %937 = vmatpush1.msra.mxu0 0.0
  %938 = vmatprep.subr.mxu0 0.0
  %939 = vmatpush1.msra.mxu0 0.0
  %940 = vmatprep.subr.mxu0 0.0
  %941 = vmatpush1.msra.mxu0 0.0
  %942 = vmatprep.subr.mxu0 0.0
  %943 = vmatpush1.msra.mxu0 0.0
  %944 = vmatprep.subr.mxu0 0.0
  %945 = vmatpush1.msra.mxu0 0.0
  %946 = vmatprep.subr.mxu0 0.0
  %947 = vmatpush1.msra.mxu0 0.0
  %948 = vmatprep.subr.mxu0 0.0
  %949 = vmatpush1.msra.mxu0 0.0
  %950 = vmatprep.subr.mxu0 0.0
  %951 = vmatpush1.msra.mxu0 0.0
  %952 = vmatprep.subr.mxu0 0.0
  %953 = vmatpush1.msra.mxu0 0.0
  %954 = vmatprep.subr.mxu0 0.0
  %955 = vmatpush1.msra.mxu0 0.0
  %956 = vmatprep.subr.mxu0 0.0
  %957 = vmatpush1.msra.mxu0 0.0
  %958 = vmatprep.subr.mxu0 0.0
  %959 = vmatpush1.msra.mxu0 0.0
  %960 = vmatprep.mubr.f32.mxu0 0.0
  %961 = vmatmul.mubr.f32.gmra.mrb[0].mxu0 %v824
  %v962 = vpop.f32.mrb[0].mxu0
  %v963 = vadd.f32 0.0, %v962
  %v964 = vpop.f32.mrb[0].mxu0
  %965 = vdwg.mxu0
  %v966 = vadd.f32 %v198, %v892
  %v967 = vxor.u32 %v966, 2147483648
  %v968 = vmul.f32 %v967, 1.442695
  %v969 = vpow.pop %v968
  %v970 = vadd.f32 %v969, 1.0
  %v971 = vrcp.pop %v970
  %v972 = vmul.f32 1.0, %v971
  %v973 = vadd.f32 %v200, %v894
  %v974 = vxor.u32 %v973, 2147483648
  %v975 = vmul.f32 %v974, 1.442695
  %v976 = vpow.pop %v975
  %v977 = vadd.f32 %v976, 1.0
  %v978 = vrcp.pop %v977
  %v979 = vmul.f32 1.0, %v978
  %v980 = vadd.f32 %v963, %v490
  %v981 = vmul.f32 %v972, %v980
  %v982 = vadd.f32 %v309, %v981
  %v983 = vtanh.pop %v982
  %v984 = vsub.f32 1.0, %v979
  %v985 = vmul.f32 %v984, %v983
  %v986 = vmul.f32 %v979, %v824
  %v987 = vadd.f32 %v985, %v986
  %988 = vmatprep.subr.mxu0 %v438
  %989 = vmatpush1.msra.mxu0 %v437
  %990 = vmatprep.subr.mxu0 %v441
  %991 = vmatpush1.msra.mxu0 %v440
  %992 = vmatprep.subr.mxu0 %v444
  %993 = vmatpush1.msra.mxu0 %v443
  %994 = vmatprep.subr.mxu0 %v447
  %995 = vmatpush1.msra.mxu0 %v446
  %996 = vmatprep.subr.mxu0 %v450
  %997 = vmatpush1.msra.mxu0 %v449
  %998 = vmatprep.subr.mxu0 %v453
  %999 = vmatpush1.msra.mxu0 %v452
  %1000 = vmatprep.subr.mxu0 %v456
  %1001 = vmatpush1.msra.mxu0 %v455
  %1002 = vmatprep.subr.mxu0 %v459
  %1003 = vmatpush1.msra.mxu0 %v458
  %1004 = vmatprep.subr.mxu0 %v462
  %1005 = vmatpush1.msra.mxu0 %v461
  %1006 = vmatprep.subr.mxu0 %v465
  %1007 = vmatpush1.msra.mxu0 %v464
  %1008 = vmatprep.subr.mxu0 %v468
  %1009 = vmatpush1.msra.mxu0 %v467
  %1010 = vmatprep.subr.mxu0 %v471
  %1011 = vmatpush1.msra.mxu0 %v470
  %1012 = vmatprep.subr.mxu0 %v474
  %1013 = vmatpush1.msra.mxu0 %v473
  %1014 = vmatprep.subr.mxu0 %v477
  %1015 = vmatpush1.msra.mxu0 %v476
  %1016 = vmatprep.subr.mxu0 %v480
  %1017 = vmatpush1.msra.mxu0 %v479
  %1018 = vmatprep.subr.mxu0 %v483
  %1019 = vmatpush1.msra.mxu0 %v482
  %1020 = vmatprep.subr.mxu0 0.0
  %1021 = vmatpush1.msra.mxu0 0.0
  %1022 = vmatprep.subr.mxu0 0.0
  %1023 = vmatpush1.msra.mxu0 0.0
  %1024 = vmatprep.subr.mxu0 0.0
  %1025 = vmatpush1.msra.mxu0 0.0
  %1026 = vmatprep.subr.mxu0 0.0
  %1027 = vmatpush1.msra.mxu0 0.0
  %1028 = vmatprep.subr.mxu0 0.0
  %1029 = vmatpush1.msra.mxu0 0.0
  %1030 = vmatprep.subr.mxu0 0.0
  %1031 = vmatpush1.msra.mxu0 0.0
  %1032 = vmatprep.subr.mxu0 0.0
  %1033 = vmatpush1.msra.mxu0 0.0
  %1034 = vmatprep.subr.mxu0 0.0
  %1035 = vmatpush1.msra.mxu0 0.0
  %1036 = vmatprep.subr.mxu0 0.0
  %1037 = vmatpush1.msra.mxu0 0.0
  %1038 = vmatprep.subr.mxu0 0.0
  %1039 = vmatpush1.msra.mxu0 0.0
  %1040 = vmatprep.subr.mxu0 0.0
  %1041 = vmatpush1.msra.mxu0 0.0
  %1042 = vmatprep.subr.mxu0 0.0
  %1043 = vmatpush1.msra.mxu0 0.0
  %1044 = vmatprep.subr.mxu0 0.0
  %1045 = vmatpush1.msra.mxu0 0.0
  %1046 = vmatprep.subr.mxu0 0.0
  %1047 = vmatpush1.msra.mxu0 0.0
  %1048 = vmatprep.subr.mxu0 0.0
  %1049 = vmatpush1.msra.mxu0 0.0
  %1050 = vmatprep.subr.mxu0 0.0
  %1051 = vmatpush1.msra.mxu0 0.0
  %1052 = vmatprep.mubr.f32.mxu0 0.0
  %1053 = vmatmul.mubr.f32.gmra.mrb[0].mxu0 %v987
  %v1054 = vpop.f32.mrb[0].mxu0
  %v1055 = vadd.f32 0.0, %v1054
  %v1056 = vpop.f32.mrb[0].mxu0
  %v1057 = vadd.f32 0.0, %v1056
  %1058 = vdwg.mxu0
  %1059 = vmatprep.subr.mxu0 0.0
  %1060 = vmatpush1.msra.mxu0 %v439
  %1061 = vmatprep.subr.mxu0 0.0
  %1062 = vmatpush1.msra.mxu0 %v442
  %1063 = vmatprep.subr.mxu0 0.0
  %1064 = vmatpush1.msra.mxu0 %v445
  %1065 = vmatprep.subr.mxu0 0.0
  %1066 = vmatpush1.msra.mxu0 %v448
  %1067 = vmatprep.subr.mxu0 0.0
  %1068 = vmatpush1.msra.mxu0 %v451
  %1069 = vmatprep.subr.mxu0 0.0
  %1070 = vmatpush1.msra.mxu0 %v454
  %1071 = vmatprep.subr.mxu0 0.0
  %1072 = vmatpush1.msra.mxu0 %v457
  %1073 = vmatprep.subr.mxu0 0.0
  %1074 = vmatpush1.msra.mxu0 %v460
  %1075 = vmatprep.subr.mxu0 0.0
  %1076 = vmatpush1.msra.mxu0 %v463
  %1077 = vmatprep.subr.mxu0 0.0
  %1078 = vmatpush1.msra.mxu0 %v466
  %1079 = vmatprep.subr.mxu0 0.0
  %1080 = vmatpush1.msra.mxu0 %v469
  %1081 = vmatprep.subr.mxu0 0.0
  %1082 = vmatpush1.msra.mxu0 %v472
  %1083 = vmatprep.subr.mxu0 0.0
  %1084 = vmatpush1.msra.mxu0 %v475
  %1085 = vmatprep.subr.mxu0 0.0
  %1086 = vmatpush1.msra.mxu0 %v478
  %1087 = vmatprep.subr.mxu0 0.0
  %1088 = vmatpush1.msra.mxu0 %v481
  %1089 = vmatprep.subr.mxu0 0.0
  %1090 = vmatpush1.msra.mxu0 %v484
  %1091 = vmatprep.subr.mxu0 0.0
  %1092 = vmatpush1.msra.mxu0 0.0
  %1093 = vmatprep.subr.mxu0 0.0
  %1094 = vmatpush1.msra.mxu0 0.0
  %1095 = vmatprep.subr.mxu0 0.0
  %1096 = vmatpush1.msra.mxu0 0.0
  %1097 = vmatprep.subr.mxu0 0.0
  %1098 = vmatpush1.msra.mxu0 0.0
  %1099 = vmatprep.subr.mxu0 0.0
  %1100 = vmatpush1.msra.mxu0 0.0
  %1101 = vmatprep.subr.mxu0 0.0
  %1102 = vmatpush1.msra.mxu0 0.0
  %1103 = vmatprep.subr.mxu0 0.0
  %1104 = vmatpush1.msra.mxu0 0.0
  %1105 = vmatprep.subr.mxu0 0.0
  %1106 = vmatpush1.msra.mxu0 0.0
  %1107 = vmatprep.subr.mxu0 0.0
  %1108 = vmatpush1.msra.mxu0 0.0
  %1109 = vmatprep.subr.mxu0 0.0
  %1110 = vmatpush1.msra.mxu0 0.0
  %1111 = vmatprep.subr.mxu0 0.0
  %1112 = vmatpush1.msra.mxu0 0.0
  %1113 = vmatprep.subr.mxu0 0.0
  %1114 = vmatpush1.msra.mxu0 0.0
  %1115 = vmatprep.subr.mxu0 0.0
  %1116 = vmatpush1.msra.mxu0 0.0
  %1117 = vmatprep.subr.mxu0 0.0
  %1118 = vmatpush1.msra.mxu0 0.0
  %1119 = vmatprep.subr.mxu0 0.0
  %1120 = vmatpush1.msra.mxu0 0.0
  %1121 = vmatprep.subr.mxu0 0.0
  %1122 = vmatpush1.msra.mxu0 0.0
  %1123 = vmatprep.mubr.f32.mxu0 0.0
  %1124 = vmatmul.mubr.f32.gmra.mrb[0].mxu0 %v987
  %v1125 = vpop.f32.mrb[0].mxu0
  %v1126 = vadd.f32 0.0, %v1125
  %v1127 = vpop.f32.mrb[0].mxu0
  %1128 = vdwg.mxu0
  %v1129 = vadd.f32 %v204, %v1055
  %v1130 = vxor.u32 %v1129, 2147483648
  %v1131 = vmul.f32 %v1130, 1.442695
  %v1132 = vpow.pop %v1131
  %v1133 = vadd.f32 %v1132, 1.0
  %v1134 = vrcp.pop %v1133
  %v1135 = vmul.f32 1.0, %v1134
  %v1136 = vadd.f32 %v206, %v1057
  %v1137 = vxor.u32 %v1136, 2147483648
  %v1138 = vmul.f32 %v1137, 1.442695
  %v1139 = vpow.pop %v1138
  %v1140 = vadd.f32 %v1139, 1.0
  %v1141 = vrcp.pop %v1140
  %v1142 = vmul.f32 1.0, %v1141
  %v1143 = vadd.f32 %v1126, %v490
  %v1144 = vmul.f32 %v1135, %v1143
  %v1145 = vadd.f32 %v314, %v1144
  %v1146 = vtanh.pop %v1145
  %v1147 = vsub.f32 1.0, %v1142
  %v1148 = vmul.f32 %v1147, %v1146
  %v1149 = vmul.f32 %v1142, %v987
  %v1150 = vadd.f32 %v1148, %v1149
  %1151 = vmatprep.subr.mxu0 %v438
  %1152 = vmatpush1.msra.mxu0 %v437
  %1153 = vmatprep.subr.mxu0 %v441
  %1154 = vmatpush1.msra.mxu0 %v440
  %1155 = vmatprep.subr.mxu0 %v444
  %1156 = vmatpush1.msra.mxu0 %v443
  %1157 = vmatprep.subr.mxu0 %v447
  %1158 = vmatpush1.msra.mxu0 %v446
  %1159 = vmatprep.subr.mxu0 %v450
  %1160 = vmatpush1.msra.mxu0 %v449
  %1161 = vmatprep.subr.mxu0 %v453
  %1162 = vmatpush1.msra.mxu0 %v452
  %1163 = vmatprep.subr.mxu0 %v456
  %1164 = vmatpush1.msra.mxu0 %v455
  %1165 = vmatprep.subr.mxu0 %v459
  %1166 = vmatpush1.msra.mxu0 %v458
  %1167 = vmatprep.subr.mxu0 %v462
  %1168 = vmatpush1.msra.mxu0 %v461
  %1169 = vmatprep.subr.mxu0 %v465
  %1170 = vmatpush1.msra.mxu0 %v464
  %1171 = vmatprep.subr.mxu0 %v468
  %1172 = vmatpush1.msra.mxu0 %v467
  %1173 = vmatprep.subr.mxu0 %v471
  %1174 = vmatpush1.msra.mxu0 %v470
  %1175 = vmatprep.subr.mxu0 %v474
  %1176 = vmatpush1.msra.mxu0 %v473
  %1177 = vmatprep.subr.mxu0 %v477
  %1178 = vmatpush1.msra.mxu0 %v476
  %1179 = vmatprep.subr.mxu0 %v480
  %1180 = vmatpush1.msra.mxu0 %v479
  %1181 = vmatprep.subr.mxu0 %v483
  %1182 = vmatpush1.msra.mxu0 %v482
  %1183 = vmatprep.subr.mxu0 0.0
  %1184 = vmatpush1.msra.mxu0 0.0
  %1185 = vmatprep.subr.mxu0 0.0
  %1186 = vmatpush1.msra.mxu0 0.0
  %1187 = vmatprep.subr.mxu0 0.0
  %1188 = vmatpush1.msra.mxu0 0.0
  %1189 = vmatprep.subr.mxu0 0.0
  %1190 = vmatpush1.msra.mxu0 0.0
  %1191 = vmatprep.subr.mxu0 0.0
  %1192 = vmatpush1.msra.mxu0 0.0
  %1193 = vmatprep.subr.mxu0 0.0
  %1194 = vmatpush1.msra.mxu0 0.0
  %1195 = vmatprep.subr.mxu0 0.0
  %1196 = vmatpush1.msra.mxu0 0.0
  %1197 = vmatprep.subr.mxu0 0.0
  %1198 = vmatpush1.msra.mxu0 0.0
  %1199 = vmatprep.subr.mxu0 0.0
  %1200 = vmatpush1.msra.mxu0 0.0
  %1201 = vmatprep.subr.mxu0 0.0
  %1202 = vmatpush1.msra.mxu0 0.0
  %1203 = vmatprep.subr.mxu0 0.0
  %1204 = vmatpush1.msra.mxu0 0.0
  %1205 = vmatprep.subr.mxu0 0.0
  %1206 = vmatpush1.msra.mxu0 0.0
  %1207 = vmatprep.subr.mxu0 0.0
  %1208 = vmatpush1.msra.mxu0 0.0
  %1209 = vmatprep.subr.mxu0 0.0
  %1210 = vmatpush1.msra.mxu0 0.0
  %1211 = vmatprep.subr.mxu0 0.0
  %1212 = vmatpush1.msra.mxu0 0.0
  %1213 = vmatprep.subr.mxu0 0.0
  %1214 = vmatpush1.msra.mxu0 0.0
  %1215 = vmatprep.mubr.f32.mxu0 0.0
  %1216 = vmatmul.mubr.f32.gmra.mrb[0].mxu0 %v1150
  %v1217 = vpop.f32.mrb[0].mxu0
  %v1218 = vadd.f32 0.0, %v1217
  %v1219 = vpop.f32.mrb[0].mxu0
  %v1220 = vadd.f32 0.0, %v1219
  %1221 = vdwg.mxu0
  %1222 = vmatprep.subr.mxu0 0.0
  %1223 = vmatpush1.msra.mxu0 %v439
  %1224 = vmatprep.subr.mxu0 0.0
  %1225 = vmatpush1.msra.mxu0 %v442
  %1226 = vmatprep.subr.mxu0 0.0
  %1227 = vmatpush1.msra.mxu0 %v445
  %1228 = vmatprep.subr.mxu0 0.0
  %1229 = vmatpush1.msra.mxu0 %v448
  %1230 = vmatprep.subr.mxu0 0.0
  %1231 = vmatpush1.msra.mxu0 %v451
  %1232 = vmatprep.subr.mxu0 0.0
  %1233 = vmatpush1.msra.mxu0 %v454
  %1234 = vmatprep.subr.mxu0 0.0
  %1235 = vmatpush1.msra.mxu0 %v457
  %1236 = vmatprep.subr.mxu0 0.0
  %1237 = vmatpush1.msra.mxu0 %v460
  %1238 = vmatprep.subr.mxu0 0.0
  %1239 = vmatpush1.msra.mxu0 %v463
  %1240 = vmatprep.subr.mxu0 0.0
  %1241 = vmatpush1.msra.mxu0 %v466
  %1242 = vmatprep.subr.mxu0 0.0
  %1243 = vmatpush1.msra.mxu0 %v469
  %1244 = vmatprep.subr.mxu0 0.0
  %1245 = vmatpush1.msra.mxu0 %v472
  %1246 = vmatprep.subr.mxu0 0.0
  %1247 = vmatpush1.msra.mxu0 %v475
  %1248 = vmatprep.subr.mxu0 0.0
  %1249 = vmatpush1.msra.mxu0 %v478
  %1250 = vmatprep.subr.mxu0 0.0
  %1251 = vmatpush1.msra.mxu0 %v481
  %1252 = vmatprep.subr.mxu0 0.0
  %1253 = vmatpush1.msra.mxu0 %v484
  %1254 = vmatprep.subr.mxu0 0.0
  %1255 = vmatpush1.msra.mxu0 0.0
  %1256 = vmatprep.subr.mxu0 0.0
  %1257 = vmatpush1.msra.mxu0 0.0
  %1258 = vmatprep.subr.mxu0 0.0
  %1259 = vmatpush1.msra.mxu0 0.0
  %1260 = vmatprep.subr.mxu0 0.0
  %1261 = vmatpush1.msra.mxu0 0.0
  %1262 = vmatprep.subr.mxu0 0.0
  %1263 = vmatpush1.msra.mxu0 0.0
  %1264 = vmatprep.subr.mxu0 0.0
  %1265 = vmatpush1.msra.mxu0 0.0
  %1266 = vmatprep.subr.mxu0 0.0
  %1267 = vmatpush1.msra.mxu0 0.0
  %1268 = vmatprep.subr.mxu0 0.0
  %1269 = vmatpush1.msra.mxu0 0.0
  %1270 = vmatprep.subr.mxu0 0.0
  %1271 = vmatpush1.msra.mxu0 0.0
  %1272 = vmatprep.subr.mxu0 0.0
  %1273 = vmatpush1.msra.mxu0 0.0
  %1274 = vmatprep.subr.mxu0 0.0
  %1275 = vmatpush1.msra.mxu0 0.0
  %1276 = vmatprep.subr.mxu0 0.0
  %1277 = vmatpush1.msra.mxu0 0.0
  %1278 = vmatprep.subr.mxu0 0.0
  %1279 = vmatpush1.msra.mxu0 0.0
  %1280 = vmatprep.subr.mxu0 0.0
  %1281 = vmatpush1.msra.mxu0 0.0
  %1282 = vmatprep.subr.mxu0 0.0
  %1283 = vmatpush1.msra.mxu0 0.0
  %1284 = vmatprep.subr.mxu0 0.0
  %1285 = vmatpush1.msra.mxu0 0.0
  %1286 = vmatprep.mubr.f32.mxu0 0.0
  %1287 = vmatmul.mubr.f32.gmra.mrb[0].mxu0 %v1150
  %v1288 = vpop.f32.mrb[0].mxu0
  %v1289 = vadd.f32 0.0, %v1288
  %v1290 = vpop.f32.mrb[0].mxu0
  %1291 = vdwg.mxu0
  %v1292 = vadd.f32 %v210, %v1218
  %v1293 = vxor.u32 %v1292, 2147483648
  %v1294 = vmul.f32 %v1293, 1.442695
  %v1295 = vpow.pop %v1294
  %v1296 = vadd.f32 %v1295, 1.0
  %v1297 = vrcp.pop %v1296
  %v1298 = vmul.f32 1.0, %v1297
  %v1299 = vadd.f32 %v212, %v1220
  %v1300 = vxor.u32 %v1299, 2147483648
  %v1301 = vmul.f32 %v1300, 1.442695
  %v1302 = vpow.pop %v1301
  %v1303 = vadd.f32 %v1302, 1.0
  %v1304 = vrcp.pop %v1303
  %v1305 = vmul.f32 1.0, %v1304
  %v1306 = vadd.f32 %v1289, %v490
  %v1307 = vmul.f32 %v1298, %v1306
  %v1308 = vadd.f32 %v319, %v1307
  %v1309 = vtanh.pop %v1308
  %v1310 = vsub.f32 1.0, %v1305
  %v1311 = vmul.f32 %v1310, %v1309
  %v1312 = vmul.f32 %v1305, %v1150
  %v1313 = vadd.f32 %v1311, %v1312
  %1314 = vmatprep.subr.mxu0 %v438
  %1315 = vmatpush1.msra.mxu0 %v437
  %1316 = vmatprep.subr.mxu0 %v441
  %1317 = vmatpush1.msra.mxu0 %v440
  %1318 = vmatprep.subr.mxu0 %v444
  %1319 = vmatpush1.msra.mxu0 %v443
  %1320 = vmatprep.subr.mxu0 %v447
  %1321 = vmatpush1.msra.mxu0 %v446
  %1322 = vmatprep.subr.mxu0 %v450
  %1323 = vmatpush1.msra.mxu0 %v449
  %1324 = vmatprep.subr.mxu0 %v453
  %1325 = vmatpush1.msra.mxu0 %v452
  %1326 = vmatprep.subr.mxu0 %v456
  %1327 = vmatpush1.msra.mxu0 %v455
  %1328 = vmatprep.subr.mxu0 %v459
  %1329 = vmatpush1.msra.mxu0 %v458
  %1330 = vmatprep.subr.mxu0 %v462
  %1331 = vmatpush1.msra.mxu0 %v461
  %1332 = vmatprep.subr.mxu0 %v465
  %1333 = vmatpush1.msra.mxu0 %v464
  %1334 = vmatprep.subr.mxu0 %v468
  %1335 = vmatpush1.msra.mxu0 %v467
  %1336 = vmatprep.subr.mxu0 %v471
  %1337 = vmatpush1.msra.mxu0 %v470
  %1338 = vmatprep.subr.mxu0 %v474
  %1339 = vmatpush1.msra.mxu0 %v473
  %1340 = vmatprep.subr.mxu0 %v477
  %1341 = vmatpush1.msra.mxu0 %v476
  %1342 = vmatprep.subr.mxu0 %v480
  %1343 = vmatpush1.msra.mxu0 %v479
  %1344 = vmatprep.subr.mxu0 %v483
  %1345 = vmatpush1.msra.mxu0 %v482
  %1346 = vmatprep.subr.mxu0 0.0
  %1347 = vmatpush1.msra.mxu0 0.0
  %1348 = vmatprep.subr.mxu0 0.0
  %1349 = vmatpush1.msra.mxu0 0.0
  %1350 = vmatprep.subr.mxu0 0.0
  %1351 = vmatpush1.msra.mxu0 0.0
  %1352 = vmatprep.subr.mxu0 0.0
  %1353 = vmatpush1.msra.mxu0 0.0
  %1354 = vmatprep.subr.mxu0 0.0
  %1355 = vmatpush1.msra.mxu0 0.0
  %1356 = vmatprep.subr.mxu0 0.0
  %1357 = vmatpush1.msra.mxu0 0.0
  %1358 = vmatprep.subr.mxu0 0.0
  %1359 = vmatpush1.msra.mxu0 0.0
  %1360 = vmatprep.subr.mxu0 0.0
  %1361 = vmatpush1.msra.mxu0 0.0
  %1362 = vmatprep.subr.mxu0 0.0
  %1363 = vmatpush1.msra.mxu0 0.0
  %1364 = vmatprep.subr.mxu0 0.0
  %1365 = vmatpush1.msra.mxu0 0.0
  %1366 = vmatprep.subr.mxu0 0.0
  %1367 = vmatpush1.msra.mxu0 0.0
  %1368 = vmatprep.subr.mxu0 0.0
  %1369 = vmatpush1.msra.mxu0 0.0
  %1370 = vmatprep.subr.mxu0 0.0
  %1371 = vmatpush1.msra.mxu0 0.0
  %1372 = vmatprep.subr.mxu0 0.0
  %1373 = vmatpush1.msra.mxu0 0.0
  %1374 = vmatprep.subr.mxu0 0.0
  %1375 = vmatpush1.msra.mxu0 0.0
  %1376 = vmatprep.subr.mxu0 0.0
  %1377 = vmatpush1.msra.mxu0 0.0
  %1378 = vmatprep.mubr.f32.mxu0 0.0
  %1379 = vmatmul.mubr.f32.gmra.mrb[0].mxu0 %v1313
  %v1380 = vpop.f32.mrb[0].mxu0
  %v1381 = vadd.f32 0.0, %v1380
  %v1382 = vpop.f32.mrb[0].mxu0
  %v1383 = vadd.f32 0.0, %v1382
  %1384 = vdwg.mxu0
  %1385 = vmatprep.subr.mxu0 0.0
  %1386 = vmatpush1.msra.mxu0 %v439
  %1387 = vmatprep.subr.mxu0 0.0
  %1388 = vmatpush1.msra.mxu0 %v442
  %1389 = vmatprep.subr.mxu0 0.0
  %1390 = vmatpush1.msra.mxu0 %v445
  %1391 = vmatprep.subr.mxu0 0.0
  %1392 = vmatpush1.msra.mxu0 %v448
  %1393 = vmatprep.subr.mxu0 0.0
  %1394 = vmatpush1.msra.mxu0 %v451
  %1395 = vmatprep.subr.mxu0 0.0
  %1396 = vmatpush1.msra.mxu0 %v454
  %1397 = vmatprep.subr.mxu0 0.0
  %1398 = vmatpush1.msra.mxu0 %v457
  %1399 = vmatprep.subr.mxu0 0.0
  %1400 = vmatpush1.msra.mxu0 %v460
  %1401 = vmatprep.subr.mxu0 0.0
  %1402 = vmatpush1.msra.mxu0 %v463
  %1403 = vmatprep.subr.mxu0 0.0
  %1404 = vmatpush1.msra.mxu0 %v466
  %1405 = vmatprep.subr.mxu0 0.0
  %1406 = vmatpush1.msra.mxu0 %v469
  %1407 = vmatprep.subr.mxu0 0.0
  %1408 = vmatpush1.msra.mxu0 %v472
  %1409 = vmatprep.subr.mxu0 0.0
  %1410 = vmatpush1.msra.mxu0 %v475
  %1411 = vmatprep.subr.mxu0 0.0
  %1412 = vmatpush1.msra.mxu0 %v478
  %1413 = vmatprep.subr.mxu0 0.0
  %1414 = vmatpush1.msra.mxu0 %v481
  %1415 = vmatprep.subr.mxu0 0.0
  %1416 = vmatpush1.msra.mxu0 %v484
  %1417 = vmatprep.subr.mxu0 0.0
  %1418 = vmatpush1.msra.mxu0 0.0
  %1419 = vmatprep.subr.mxu0 0.0
  %1420 = vmatpush1.msra.mxu0 0.0
  %1421 = vmatprep.subr.mxu0 0.0
  %1422 = vmatpush1.msra.mxu0 0.0
  %1423 = vmatprep.subr.mxu0 0.0
  %1424 = vmatpush1.msra.mxu0 0.0
  %1425 = vmatprep.subr.mxu0 0.0
  %1426 = vmatpush1.msra.mxu0 0.0
  %1427 = vmatprep.subr.mxu0 0.0
  %1428 = vmatpush1.msra.mxu0 0.0
  %1429 = vmatprep.subr.mxu0 0.0
  %1430 = vmatpush1.msra.mxu0 0.0
  %1431 = vmatprep.subr.mxu0 0.0
  %1432 = vmatpush1.msra.mxu0 0.0
  %1433 = vmatprep.subr.mxu0 0.0
  %1434 = vmatpush1.msra.mxu0 0.0
  %1435 = vmatprep.subr.mxu0 0.0
  %1436 = vmatpush1.msra.mxu0 0.0
  %1437 = vmatprep.subr.mxu0 0.0
  %1438 = vmatpush1.msra.mxu0 0.0
  %1439 = vmatprep.subr.mxu0 0.0
  %1440 = vmatpush1.msra.mxu0 0.0
  %1441 = vmatprep.subr.mxu0 0.0
  %1442 = vmatpush1.msra.mxu0 0.0
  %1443 = vmatprep.subr.mxu0 0.0
  %1444 = vmatpush1.msra.mxu0 0.0
  %1445 = vmatprep.subr.mxu0 0.0
  %1446 = vmatpush1.msra.mxu0 0.0
  %1447 = vmatprep.subr.mxu0 0.0
  %1448 = vmatpush1.msra.mxu0 0.0
  %1449 = vmatprep.mubr.f32.mxu0 0.0
  %1450 = vmatmul.mubr.f32.gmra.mrb[0].mxu0 %v1313
  %v1451 = vpop.f32.mrb[0].mxu0
  %v1452 = vadd.f32 0.0, %v1451
  %v1453 = vpop.f32.mrb[0].mxu0
  %1454 = vdwg.mxu0
  %v1455 = vadd.f32 %v216, %v1381
  %v1456 = vxor.u32 %v1455, 2147483648
  %v1457 = vmul.f32 %v1456, 1.442695
  %v1458 = vpow.pop %v1457
  %v1459 = vadd.f32 %v1458, 1.0
  %v1460 = vrcp.pop %v1459
  %v1461 = vmul.f32 1.0, %v1460
  %v1462 = vadd.f32 %v218, %v1383
  %v1463 = vxor.u32 %v1462, 2147483648
  %v1464 = vmul.f32 %v1463, 1.442695
  %v1465 = vpow.pop %v1464
  %v1466 = vadd.f32 %v1465, 1.0
  %v1467 = vrcp.pop %v1466
  %v1468 = vmul.f32 1.0, %v1467
  %v1469 = vadd.f32 %v1452, %v490
  %v1470 = vmul.f32 %v1461, %v1469
  %v1471 = vadd.f32 %v324, %v1470
  %v1472 = vtanh.pop %v1471
  %v1473 = vsub.f32 1.0, %v1468
  %v1474 = vmul.f32 %v1473, %v1472
  %v1475 = vmul.f32 %v1468, %v1313
  %v1476 = vadd.f32 %v1474, %v1475
  %1477 = vmatprep.subr.mxu0 %v438
  %1478 = vmatpush1.msra.mxu0 %v437
  %1479 = vmatprep.subr.mxu0 %v441
  %1480 = vmatpush1.msra.mxu0 %v440
  %1481 = vmatprep.subr.mxu0 %v444
  %1482 = vmatpush1.msra.mxu0 %v443
  %1483 = vmatprep.subr.mxu0 %v447
  %1484 = vmatpush1.msra.mxu0 %v446
  %1485 = vmatprep.subr.mxu0 %v450
  %1486 = vmatpush1.msra.mxu0 %v449
  %1487 = vmatprep.subr.mxu0 %v453
  %1488 = vmatpush1.msra.mxu0 %v452
  %1489 = vmatprep.subr.mxu0 %v456
  %1490 = vmatpush1.msra.mxu0 %v455
  %1491 = vmatprep.subr.mxu0 %v459
  %1492 = vmatpush1.msra.mxu0 %v458
  %1493 = vmatprep.subr.mxu0 %v462
  %1494 = vmatpush1.msra.mxu0 %v461
  %1495 = vmatprep.subr.mxu0 %v465
  %1496 = vmatpush1.msra.mxu0 %v464
  %1497 = vmatprep.subr.mxu0 %v468
  %1498 = vmatpush1.msra.mxu0 %v467
  %1499 = vmatprep.subr.mxu0 %v471
  %1500 = vmatpush1.msra.mxu0 %v470
  %1501 = vmatprep.subr.mxu0 %v474
  %1502 = vmatpush1.msra.mxu0 %v473
  %1503 = vmatprep.subr.mxu0 %v477
  %1504 = vmatpush1.msra.mxu0 %v476
  %1505 = vmatprep.subr.mxu0 %v480
  %1506 = vmatpush1.msra.mxu0 %v479
  %1507 = vmatprep.subr.mxu0 %v483
  %1508 = vmatpush1.msra.mxu0 %v482
  %1509 = vmatprep.subr.mxu0 0.0
  %1510 = vmatpush1.msra.mxu0 0.0
  %1511 = vmatprep.subr.mxu0 0.0
  %1512 = vmatpush1.msra.mxu0 0.0
  %1513 = vmatprep.subr.mxu0 0.0
  %1514 = vmatpush1.msra.mxu0 0.0
  %1515 = vmatprep.subr.mxu0 0.0
  %1516 = vmatpush1.msra.mxu0 0.0
  %1517 = vmatprep.subr.mxu0 0.0
  %1518 = vmatpush1.msra.mxu0 0.0
  %1519 = vmatprep.subr.mxu0 0.0
  %1520 = vmatpush1.msra.mxu0 0.0
  %1521 = vmatprep.subr.mxu0 0.0
  %1522 = vmatpush1.msra.mxu0 0.0
  %1523 = vmatprep.subr.mxu0 0.0
  %1524 = vmatpush1.msra.mxu0 0.0
  %1525 = vmatprep.subr.mxu0 0.0
  %1526 = vmatpush1.msra.mxu0 0.0
  %1527 = vmatprep.subr.mxu0 0.0
  %1528 = vmatpush1.msra.mxu0 0.0
  %1529 = vmatprep.subr.mxu0 0.0
  %1530 = vmatpush1.msra.mxu0 0.0
  %1531 = vmatprep.subr.mxu0 0.0
  %1532 = vmatpush1.msra.mxu0 0.0
  %1533 = vmatprep.subr.mxu0 0.0
  %1534 = vmatpush1.msra.mxu0 0.0
  %1535 = vmatprep.subr.mxu0 0.0
  %1536 = vmatpush1.msra.mxu0 0.0
  %1537 = vmatprep.subr.mxu0 0.0
  %1538 = vmatpush1.msra.mxu0 0.0
  %1539 = vmatprep.subr.mxu0 0.0
  %1540 = vmatpush1.msra.mxu0 0.0
  %1541 = vmatprep.mubr.f32.mxu0 0.0
  %1542 = vmatmul.mubr.f32.gmra.mrb[0].mxu0 %v1476
  %v1543 = vpop.f32.mrb[0].mxu0
  %v1544 = vadd.f32 0.0, %v1543
  %v1545 = vpop.f32.mrb[0].mxu0
  %v1546 = vadd.f32 0.0, %v1545
  %1547 = vdwg.mxu0
  %1548 = vmatprep.subr.mxu0 0.0
  %1549 = vmatpush1.msra.mxu0 %v439
  %1550 = vmatprep.subr.mxu0 0.0
  %1551 = vmatpush1.msra.mxu0 %v442
  %1552 = vmatprep.subr.mxu0 0.0
  %1553 = vmatpush1.msra.mxu0 %v445
  %1554 = vmatprep.subr.mxu0 0.0
  %1555 = vmatpush1.msra.mxu0 %v448
  %1556 = vmatprep.subr.mxu0 0.0
  %1557 = vmatpush1.msra.mxu0 %v451
  %1558 = vmatprep.subr.mxu0 0.0
  %1559 = vmatpush1.msra.mxu0 %v454
  %1560 = vmatprep.subr.mxu0 0.0
  %1561 = vmatpush1.msra.mxu0 %v457
  %1562 = vmatprep.subr.mxu0 0.0
  %1563 = vmatpush1.msra.mxu0 %v460
  %1564 = vmatprep.subr.mxu0 0.0
  %1565 = vmatpush1.msra.mxu0 %v463
  %1566 = vmatprep.subr.mxu0 0.0
  %1567 = vmatpush1.msra.mxu0 %v466
  %1568 = vmatprep.subr.mxu0 0.0
  %1569 = vmatpush1.msra.mxu0 %v469
  %1570 = vmatprep.subr.mxu0 0.0
  %1571 = vmatpush1.msra.mxu0 %v472
  %1572 = vmatprep.subr.mxu0 0.0
  %1573 = vmatpush1.msra.mxu0 %v475
  %1574 = vmatprep.subr.mxu0 0.0
  %1575 = vmatpush1.msra.mxu0 %v478
  %1576 = vmatprep.subr.mxu0 0.0
  %1577 = vmatpush1.msra.mxu0 %v481
  %1578 = vmatprep.subr.mxu0 0.0
  %1579 = vmatpush1.msra.mxu0 %v484
  %1580 = vmatprep.subr.mxu0 0.0
  %1581 = vmatpush1.msra.mxu0 0.0
  %1582 = vmatprep.subr.mxu0 0.0
  %1583 = vmatpush1.msra.mxu0 0.0
  %1584 = vmatprep.subr.mxu0 0.0
  %1585 = vmatpush1.msra.mxu0 0.0
  %1586 = vmatprep.subr.mxu0 0.0
  %1587 = vmatpush1.msra.mxu0 0.0
  %1588 = vmatprep.subr.mxu0 0.0
  %1589 = vmatpush1.msra.mxu0 0.0
  %1590 = vmatprep.subr.mxu0 0.0
  %1591 = vmatpush1.msra.mxu0 0.0
  %1592 = vmatprep.subr.mxu0 0.0
  %1593 = vmatpush1.msra.mxu0 0.0
  %1594 = vmatprep.subr.mxu0 0.0
  %1595 = vmatpush1.msra.mxu0 0.0
  %1596 = vmatprep.subr.mxu0 0.0
  %1597 = vmatpush1.msra.mxu0 0.0
  %1598 = vmatprep.subr.mxu0 0.0
  %1599 = vmatpush1.msra.mxu0 0.0
  %1600 = vmatprep.subr.mxu0 0.0
  %1601 = vmatpush1.msra.mxu0 0.0
  %1602 = vmatprep.subr.mxu0 0.0
  %1603 = vmatpush1.msra.mxu0 0.0
  %1604 = vmatprep.subr.mxu0 0.0
  %1605 = vmatpush1.msra.mxu0 0.0
  %1606 = vmatprep.subr.mxu0 0.0
  %1607 = vmatpush1.msra.mxu0 0.0
  %1608 = vmatprep.subr.mxu0 0.0
  %1609 = vmatpush1.msra.mxu0 0.0
  %1610 = vmatprep.subr.mxu0 0.0
  %1611 = vmatpush1.msra.mxu0 0.0
  %1612 = vmatprep.mubr.f32.mxu0 0.0
  %1613 = vmatmul.mubr.f32.gmra.mrb[0].mxu0 %v1476
  %v1614 = vpop.f32.mrb[0].mxu0
  %v1615 = vadd.f32 0.0, %v1614
  %v1616 = vpop.f32.mrb[0].mxu0
  %1617 = vdwg.mxu0
  %v1618 = vadd.f32 %v222, %v1544
  %v1619 = vxor.u32 %v1618, 2147483648
  %v1620 = vmul.f32 %v1619, 1.442695
  %v1621 = vpow.pop %v1620
  %v1622 = vadd.f32 %v1621, 1.0
  %v1623 = vrcp.pop %v1622
  %v1624 = vmul.f32 1.0, %v1623
  %v1625 = vadd.f32 %v224, %v1546
  %v1626 = vxor.u32 %v1625, 2147483648
  %v1627 = vmul.f32 %v1626, 1.442695
  %v1628 = vpow.pop %v1627
  %v1629 = vadd.f32 %v1628, 1.0
  %v1630 = vrcp.pop %v1629
  %v1631 = vmul.f32 1.0, %v1630
  %v1632 = vadd.f32 %v1615, %v490
  %v1633 = vmul.f32 %v1624, %v1632
  %v1634 = vadd.f32 %v329, %v1633
  %v1635 = vtanh.pop %v1634
  %v1636 = vsub.f32 1.0, %v1631
  %v1637 = vmul.f32 %v1636, %v1635
  %v1638 = vmul.f32 %v1631, %v1476
  %v1639 = vadd.f32 %v1637, %v1638
  %1640 = vmatprep.subr.mxu0 %v438
  %1641 = vmatpush1.msra.mxu0 %v437
  %1642 = vmatprep.subr.mxu0 %v441
  %1643 = vmatpush1.msra.mxu0 %v440
  %1644 = vmatprep.subr.mxu0 %v444
  %1645 = vmatpush1.msra.mxu0 %v443
  %1646 = vmatprep.subr.mxu0 %v447
  %1647 = vmatpush1.msra.mxu0 %v446
  %1648 = vmatprep.subr.mxu0 %v450
  %1649 = vmatpush1.msra.mxu0 %v449
  %1650 = vmatprep.subr.mxu0 %v453
  %1651 = vmatpush1.msra.mxu0 %v452
  %1652 = vmatprep.subr.mxu0 %v456
  %1653 = vmatpush1.msra.mxu0 %v455
  %1654 = vmatprep.subr.mxu0 %v459
  %1655 = vmatpush1.msra.mxu0 %v458
  %1656 = vmatprep.subr.mxu0 %v462
  %1657 = vmatpush1.msra.mxu0 %v461
  %1658 = vmatprep.subr.mxu0 %v465
  %1659 = vmatpush1.msra.mxu0 %v464
  %1660 = vmatprep.subr.mxu0 %v468
  %1661 = vmatpush1.msra.mxu0 %v467
  %1662 = vmatprep.subr.mxu0 %v471
  %1663 = vmatpush1.msra.mxu0 %v470
  %1664 = vmatprep.subr.mxu0 %v474
  %1665 = vmatpush1.msra.mxu0 %v473
  %1666 = vmatprep.subr.mxu0 %v477
  %1667 = vmatpush1.msra.mxu0 %v476
  %1668 = vmatprep.subr.mxu0 %v480
  %1669 = vmatpush1.msra.mxu0 %v479
  %1670 = vmatprep.subr.mxu0 %v483
  %1671 = vmatpush1.msra.mxu0 %v482
  %1672 = vmatprep.subr.mxu0 0.0
  %1673 = vmatpush1.msra.mxu0 0.0
  %1674 = vmatprep.subr.mxu0 0.0
  %1675 = vmatpush1.msra.mxu0 0.0
  %1676 = vmatprep.subr.mxu0 0.0
  %1677 = vmatpush1.msra.mxu0 0.0
  %1678 = vmatprep.subr.mxu0 0.0
  %1679 = vmatpush1.msra.mxu0 0.0
  %1680 = vmatprep.subr.mxu0 0.0
  %1681 = vmatpush1.msra.mxu0 0.0
  %1682 = vmatprep.subr.mxu0 0.0
  %1683 = vmatpush1.msra.mxu0 0.0
  %1684 = vmatprep.subr.mxu0 0.0
  %1685 = vmatpush1.msra.mxu0 0.0
  %1686 = vmatprep.subr.mxu0 0.0
  %1687 = vmatpush1.msra.mxu0 0.0
  %1688 = vmatprep.subr.mxu0 0.0
  %1689 = vmatpush1.msra.mxu0 0.0
  %1690 = vmatprep.subr.mxu0 0.0
  %1691 = vmatpush1.msra.mxu0 0.0
  %1692 = vmatprep.subr.mxu0 0.0
  %1693 = vmatpush1.msra.mxu0 0.0
  %1694 = vmatprep.subr.mxu0 0.0
  %1695 = vmatpush1.msra.mxu0 0.0
  %1696 = vmatprep.subr.mxu0 0.0
  %1697 = vmatpush1.msra.mxu0 0.0
  %1698 = vmatprep.subr.mxu0 0.0
  %1699 = vmatpush1.msra.mxu0 0.0
  %1700 = vmatprep.subr.mxu0 0.0
  %1701 = vmatpush1.msra.mxu0 0.0
  %1702 = vmatprep.subr.mxu0 0.0
  %1703 = vmatpush1.msra.mxu0 0.0
  %1704 = vmatprep.mubr.f32.mxu0 0.0
  %1705 = vmatmul.mubr.f32.gmra.mrb[0].mxu0 %v1639
  %v1706 = vpop.f32.mrb[0].mxu0
  %v1707 = vadd.f32 0.0, %v1706
  %v1708 = vpop.f32.mrb[0].mxu0
  %v1709 = vadd.f32 0.0, %v1708
  %1710 = vdwg.mxu0
  %1711 = vmatprep.subr.mxu0 0.0
  %1712 = vmatpush1.msra.mxu0 %v439
  %1713 = vmatprep.subr.mxu0 0.0
  %1714 = vmatpush1.msra.mxu0 %v442
  %1715 = vmatprep.subr.mxu0 0.0
  %1716 = vmatpush1.msra.mxu0 %v445
  %1717 = vmatprep.subr.mxu0 0.0
  %1718 = vmatpush1.msra.mxu0 %v448
  %1719 = vmatprep.subr.mxu0 0.0
  %1720 = vmatpush1.msra.mxu0 %v451
  %1721 = vmatprep.subr.mxu0 0.0
  %1722 = vmatpush1.msra.mxu0 %v454
  %1723 = vmatprep.subr.mxu0 0.0
  %1724 = vmatpush1.msra.mxu0 %v457
  %1725 = vmatprep.subr.mxu0 0.0
  %1726 = vmatpush1.msra.mxu0 %v460
  %1727 = vmatprep.subr.mxu0 0.0
  %1728 = vmatpush1.msra.mxu0 %v463
  %1729 = vmatprep.subr.mxu0 0.0
  %1730 = vmatpush1.msra.mxu0 %v466
  %1731 = vmatprep.subr.mxu0 0.0
  %1732 = vmatpush1.msra.mxu0 %v469
  %1733 = vmatprep.subr.mxu0 0.0
  %1734 = vmatpush1.msra.mxu0 %v472
  %1735 = vmatprep.subr.mxu0 0.0
  %1736 = vmatpush1.msra.mxu0 %v475
  %1737 = vmatprep.subr.mxu0 0.0
  %1738 = vmatpush1.msra.mxu0 %v478
  %1739 = vmatprep.subr.mxu0 0.0
  %1740 = vmatpush1.msra.mxu0 %v481
  %1741 = vmatprep.subr.mxu0 0.0
  %1742 = vmatpush1.msra.mxu0 %v484
  %1743 = vmatprep.subr.mxu0 0.0
  %1744 = vmatpush1.msra.mxu0 0.0
  %1745 = vmatprep.subr.mxu0 0.0
  %1746 = vmatpush1.msra.mxu0 0.0
  %1747 = vmatprep.subr.mxu0 0.0
  %1748 = vmatpush1.msra.mxu0 0.0
  %1749 = vmatprep.subr.mxu0 0.0
  %1750 = vmatpush1.msra.mxu0 0.0
  %1751 = vmatprep.subr.mxu0 0.0
  %1752 = vmatpush1.msra.mxu0 0.0
  %1753 = vmatprep.subr.mxu0 0.0
  %1754 = vmatpush1.msra.mxu0 0.0
  %1755 = vmatprep.subr.mxu0 0.0
  %1756 = vmatpush1.msra.mxu0 0.0
  %1757 = vmatprep.subr.mxu0 0.0
  %1758 = vmatpush1.msra.mxu0 0.0
  %1759 = vmatprep.subr.mxu0 0.0
  %1760 = vmatpush1.msra.mxu0 0.0
  %1761 = vmatprep.subr.mxu0 0.0
  %1762 = vmatpush1.msra.mxu0 0.0
  %1763 = vmatprep.subr.mxu0 0.0
  %1764 = vmatpush1.msra.mxu0 0.0
  %1765 = vmatprep.subr.mxu0 0.0
  %1766 = vmatpush1.msra.mxu0 0.0
  %1767 = vmatprep.subr.mxu0 0.0
  %1768 = vmatpush1.msra.mxu0 0.0
  %1769 = vmatprep.subr.mxu0 0.0
  %1770 = vmatpush1.msra.mxu0 0.0
  %1771 = vmatprep.subr.mxu0 0.0
  %1772 = vmatpush1.msra.mxu0 0.0
  %1773 = vmatprep.subr.mxu0 0.0
  %1774 = vmatpush1.msra.mxu0 0.0
  %1775 = vmatprep.mubr.f32.mxu0 0.0
  %1776 = vmatmul.mubr.f32.gmra.mrb[0].mxu0 %v1639
  %v1777 = vpop.f32.mrb[0].mxu0
  %v1778 = vadd.f32 0.0, %v1777
  %v1779 = vpop.f32.mrb[0].mxu0
  %1780 = vdwg.mxu0
  %v1781 = vadd.f32 %v228, %v1707
  %v1782 = vxor.u32 %v1781, 2147483648
  %v1783 = vmul.f32 %v1782, 1.442695
  %v1784 = vpow.pop %v1783
  %v1785 = vadd.f32 %v1784, 1.0
  %v1786 = vrcp.pop %v1785
  %v1787 = vmul.f32 1.0, %v1786
  %v1788 = vadd.f32 %v230, %v1709
  %v1789 = vxor.u32 %v1788, 2147483648
  %v1790 = vmul.f32 %v1789, 1.442695
  %v1791 = vpow.pop %v1790
  %v1792 = vadd.f32 %v1791, 1.0
  %v1793 = vrcp.pop %v1792
  %v1794 = vmul.f32 1.0, %v1793
  %v1795 = vadd.f32 %v1778, %v490
  %v1796 = vmul.f32 %v1787, %v1795
  %v1797 = vadd.f32 %v334, %v1796
  %v1798 = vtanh.pop %v1797
  %v1799 = vsub.f32 1.0, %v1794
  %v1800 = vmul.f32 %v1799, %v1798
  %v1801 = vmul.f32 %v1794, %v1639
  %v1802 = vadd.f32 %v1800, %v1801
  %v1803 = vxor.u32 %v336, 2147483648
  %v1804 = vmul.f32 %v1803, 1.442695
  %v1805 = vpow.pop %v1804
  %v1806 = vadd.f32 %v1805, 1.0
  %v1807 = vrcp.pop %v1806
  %v1808 = vmul.f32 1.0, %v1807
  %v1809 = vxor.u32 %v433, 2147483648
  %v1810 = vmul.f32 %v1809, 1.442695
  %v1811 = vpow.pop %v1810
  %v1812 = vadd.f32 %v1811, 1.0
  %v1813 = vrcp.pop %v1812
  %v1814 = vmul.f32 1.0, %v1813
  %v1815 = vmul.f32 %v1808, %v497
  %v1816 = vadd.f32 %v435, %v1815
  %v1817 = vtanh.pop %v1816
  %v1818 = vsub.f32 1.0, %v1814
  %v1819 = vmul.f32 %v1818, %v1817
  %v1820 = vld [vmem:[%s6] sm:$0xff]
  %v1821 = vld [vmem:[%s6 + $0x8] sm:$0xff]
  %v1822 = vld [vmem:[%s6 + $0x10] sm:$0xff]
  %v1823 = vld [vmem:[%s6 + $0x18] sm:$0xff]
  %v1824 = vld [vmem:[%s6 + $0x20] sm:$0xff]
  %v1825 = vld [vmem:[%s6 + $0x28] sm:$0xff]
  %v1826 = vld [vmem:[%s6 + $0x30] sm:$0xff]
  %v1827 = vld [vmem:[%s6 + $0x38] sm:$0xff]
  %v1828 = vld [vmem:[%s6 + $0x40] sm:$0xff]
  %v1829 = vld [vmem:[%s6 + $0x48] sm:$0xff]
  %v1830 = vld [vmem:[%s6 + $0x50] sm:$0xff]
  %v1831 = vld [vmem:[%s6 + $0x58] sm:$0xff]
  %v1832 = vld [vmem:[%s6 + $0x60] sm:$0xff]
  %v1833 = vld [vmem:[%s6 + $0x68] sm:$0xff]
  %v1834 = vld [vmem:[%s6 + $0x70] sm:$0xff]
  %v1835 = vld [vmem:[%s6 + $0x78] sm:$0xff]
  %v1836 = vld [vmem:[%s7] sm:$0xff]
  %v1837 = vld [vmem:[%s7 + $0x8] sm:$0xff]
  %v1838 = vld [vmem:[%s7 + $0x10] sm:$0xff]
  %v1839 = vld [vmem:[%s7 + $0x18] sm:$0xff]
  %v1840 = vld [vmem:[%s7 + $0x20] sm:$0xff]
  %v1841 = vld [vmem:[%s7 + $0x28] sm:$0xff]
  %v1842 = vld [vmem:[%s7 + $0x30] sm:$0xff]
  %v1843 = vld [vmem:[%s7 + $0x38] sm:$0xff]
  %v1844 = vld [vmem:[%s7 + $0x40] sm:$0xff]
  %v1845 = vld [vmem:[%s7 + $0x48] sm:$0xff]
  %v1846 = vld [vmem:[%s7 + $0x50] sm:$0xff]
  %v1847 = vld [vmem:[%s7 + $0x58] sm:$0xff]
  %v1848 = vld [vmem:[%s7 + $0x60] sm:$0xff]
  %v1849 = vld [vmem:[%s7 + $0x68] sm:$0xff]
  %v1850 = vld [vmem:[%s7 + $0x70] sm:$0xff]
  %v1851 = vld [vmem:[%s7 + $0x78] sm:$0xff]
  %1852 = vmatprep.subr.mxu0 0.0
  %1853 = vmatpush1.msra.mxu0 %v1836
  %1854 = vmatprep.subr.mxu0 0.0
  %1855 = vmatpush1.msra.mxu0 %v1837
  %1856 = vmatprep.subr.mxu0 0.0
  %1857 = vmatpush1.msra.mxu0 %v1838
  %1858 = vmatprep.subr.mxu0 0.0
  %1859 = vmatpush1.msra.mxu0 %v1839
  %1860 = vmatprep.subr.mxu0 0.0
  %1861 = vmatpush1.msra.mxu0 %v1840
  %1862 = vmatprep.subr.mxu0 0.0
  %1863 = vmatpush1.msra.mxu0 %v1841
  %1864 = vmatprep.subr.mxu0 0.0
  %1865 = vmatpush1.msra.mxu0 %v1842
  %1866 = vmatprep.subr.mxu0 0.0
  %1867 = vmatpush1.msra.mxu0 %v1843
  %1868 = vmatprep.subr.mxu0 0.0
  %1869 = vmatpush1.msra.mxu0 %v1844
  %1870 = vmatprep.subr.mxu0 0.0
  %1871 = vmatpush1.msra.mxu0 %v1845
  %1872 = vmatprep.subr.mxu0 0.0
  %1873 = vmatpush1.msra.mxu0 %v1846
  %1874 = vmatprep.subr.mxu0 0.0
  %1875 = vmatpush1.msra.mxu0 %v1847
  %1876 = vmatprep.subr.mxu0 0.0
  %1877 = vmatpush1.msra.mxu0 %v1848
  %1878 = vmatprep.subr.mxu0 0.0
  %1879 = vmatpush1.msra.mxu0 %v1849
  %1880 = vmatprep.subr.mxu0 0.0
  %1881 = vmatpush1.msra.mxu0 %v1850
  %1882 = vmatprep.subr.mxu0 0.0
  %1883 = vmatpush1.msra.mxu0 %v1851
  %1884 = vmatprep.subr.mxu0 0.0
  %1885 = vmatpush1.msra.mxu0 0.0
  %1886 = vmatprep.subr.mxu0 0.0
  %1887 = vmatpush1.msra.mxu0 0.0
  %1888 = vmatprep.subr.mxu0 0.0
  %1889 = vmatpush1.msra.mxu0 0.0
  %1890 = vmatprep.subr.mxu0 0.0
  %1891 = vmatpush1.msra.mxu0 0.0
  %1892 = vmatprep.subr.mxu0 0.0
  %1893 = vmatpush1.msra.mxu0 0.0
  %1894 = vmatprep.subr.mxu0 0.0
  %1895 = vmatpush1.msra.mxu0 0.0
  %1896 = vmatprep.subr.mxu0 0.0
  %1897 = vmatpush1.msra.mxu0 0.0
  %1898 = vmatprep.subr.mxu0 0.0
  %1899 = vmatpush1.msra.mxu0 0.0
  %1900 = vmatprep.subr.mxu0 0.0
  %1901 = vmatpush1.msra.mxu0 0.0
  %1902 = vmatprep.subr.mxu0 0.0
  %1903 = vmatpush1.msra.mxu0 0.0
  %1904 = vmatprep.subr.mxu0 0.0
  %1905 = vmatpush1.msra.mxu0 0.0
  %1906 = vmatprep.subr.mxu0 0.0
  %1907 = vmatpush1.msra.mxu0 0.0
  %1908 = vmatprep.subr.mxu0 0.0
  %1909 = vmatpush1.msra.mxu0 0.0
  %1910 = vmatprep.subr.mxu0 0.0
  %1911 = vmatpush1.msra.mxu0 0.0
  %1912 = vmatprep.subr.mxu0 0.0
  %1913 = vmatpush1.msra.mxu0 0.0
  %1914 = vmatprep.subr.mxu0 0.0
  %1915 = vmatpush1.msra.mxu0 0.0
  %1916 = vmatprep.mubr.f32.mxu0 0.0
  %1917 = vmatmul.mubr.f32.gmra.mrb[0].mxu0 %v1819
  %v1918 = vpop.f32.mrb[0].mxu0
  %v1919 = vadd.f32 0.0, %v1918
  %v1920 = vpop.f32.mrb[0].mxu0
  %1921 = vdwg.mxu0
  %1922 = vmatprep.subr.mxu0 0.0
  %1923 = vmatpush1.msra.mxu0 %v1820
  %1924 = vmatprep.subr.mxu0 0.0
  %1925 = vmatpush1.msra.mxu0 %v1821
  %1926 = vmatprep.subr.mxu0 0.0
  %1927 = vmatpush1.msra.mxu0 %v1822
  %1928 = vmatprep.subr.mxu0 0.0
  %1929 = vmatpush1.msra.mxu0 %v1823
  %1930 = vmatprep.subr.mxu0 0.0
  %1931 = vmatpush1.msra.mxu0 %v1824
  %1932 = vmatprep.subr.mxu0 0.0
  %1933 = vmatpush1.msra.mxu0 %v1825
  %1934 = vmatprep.subr.mxu0 0.0
  %1935 = vmatpush1.msra.mxu0 %v1826
  %1936 = vmatprep.subr.mxu0 0.0
  %1937 = vmatpush1.msra.mxu0 %v1827
  %1938 = vmatprep.subr.mxu0 0.0
  %1939 = vmatpush1.msra.mxu0 %v1828
  %1940 = vmatprep.subr.mxu0 0.0
  %1941 = vmatpush1.msra.mxu0 %v1829
  %1942 = vmatprep.subr.mxu0 0.0
  %1943 = vmatpush1.msra.mxu0 %v1830
  %1944 = vmatprep.subr.mxu0 0.0
  %1945 = vmatpush1.msra.mxu0 %v1831
  %1946 = vmatprep.subr.mxu0 0.0
  %1947 = vmatpush1.msra.mxu0 %v1832
  %1948 = vmatprep.subr.mxu0 0.0
  %1949 = vmatpush1.msra.mxu0 %v1833
  %1950 = vmatprep.subr.mxu0 0.0
  %1951 = vmatpush1.msra.mxu0 %v1834
  %1952 = vmatprep.subr.mxu0 0.0
  %1953 = vmatpush1.msra.mxu0 %v1835
  %1954 = vmatprep.subr.mxu0 0.0
  %1955 = vmatpush1.msra.mxu0 0.0
  %1956 = vmatprep.subr.mxu0 0.0
  %1957 = vmatpush1.msra.mxu0 0.0
  %1958 = vmatprep.subr.mxu0 0.0
  %1959 = vmatpush1.msra.mxu0 0.0
  %1960 = vmatprep.subr.mxu0 0.0
  %1961 = vmatpush1.msra.mxu0 0.0
  %1962 = vmatprep.subr.mxu0 0.0
  %1963 = vmatpush1.msra.mxu0 0.0
  %1964 = vmatprep.subr.mxu0 0.0
  %1965 = vmatpush1.msra.mxu0 0.0
  %1966 = vmatprep.subr.mxu0 0.0
  %1967 = vmatpush1.msra.mxu0 0.0
  %1968 = vmatprep.subr.mxu0 0.0
  %1969 = vmatpush1.msra.mxu0 0.0
  %1970 = vmatprep.subr.mxu0 0.0
  %1971 = vmatpush1.msra.mxu0 0.0
  %1972 = vmatprep.subr.mxu0 0.0
  %1973 = vmatpush1.msra.mxu0 0.0
  %1974 = vmatprep.subr.mxu0 0.0
  %1975 = vmatpush1.msra.mxu0 0.0
  %1976 = vmatprep.subr.mxu0 0.0
  %1977 = vmatpush1.msra.mxu0 0.0
  %1978 = vmatprep.subr.mxu0 0.0
  %1979 = vmatpush1.msra.mxu0 0.0
  %1980 = vmatprep.subr.mxu0 0.0
  %1981 = vmatpush1.msra.mxu0 0.0
  %1982 = vmatprep.subr.mxu0 0.0
  %1983 = vmatpush1.msra.mxu0 0.0
  %1984 = vmatprep.subr.mxu0 0.0
  %1985 = vmatpush1.msra.mxu0 0.0
  %1986 = vmatprep.mubr.f32.mxu0 0.0
  %1987 = vmatmul.mubr.f32.gmra.mrb[0].mxu0 %v1802
  %v1988 = vpop.f32.mrb[0].mxu0
  %v1989 = vadd.f32 %v1919, %v1988
  %v1990 = vpop.f32.mrb[0].mxu0
  %1991 = vdwg.mxu0
  %v1992 = vld [vmem:[%s8] sm:$0x1]
  %v1994 = vlaneseq
  %v1995 = vshrl.u32 %v1994, 7
  %v1996 = vsub.s32 0, %v1995
  %v1997 = vrot.slane %v1992, %v1996
  %v1999 = vadd.f32 %v1989, %v1997
  %2000 = vst [vmem:[%s9] sm:$0xff] %v1999
  // Predicated region
  $region38: #{rnn_encoder_forward.1} parent=0 // pred_check
    _
  $region39: #{rnn_encoder_forward.1} parent=0 // pred_check_branch
    %2002 = sbr.rel (0) target = $region41
  $region40: #{rnn_encoder_forward.1} parent=0 // pred_region
    _
  $region41: #{rnn_encoder_forward.1} parent=0 // pred_fallthru
    _
  // Predicated region
  $region42: #{rnn_encoder_forward.1} parent=0 // pred_check
    _
  $region43: #{rnn_encoder_forward.1} parent=0 // pred_check_branch
    %2004 = sbr.rel (0) target = $region45
  $region44: #{rnn_encoder_forward.1} parent=0 // pred_region
    _
  $region45: #{rnn_encoder_forward.1} parent=0 // pred_fallthru
    _

</llo_original>
